<compile_context>
chip_gen: v7x
topology: tpu7x:2x2x1
jax: 0.10.0
libtpu: 0.0.40
codegen_flags: <defaults>
</compile_context>

<pallas_src>
import jax
import jax.numpy as jnp
from jax.experimental import pallas as pl
from jax.experimental.pallas import tpu as pltpu


def fcnet_classifier_kernel(x_ref,
                            w1_ref, b1_ref, w2_ref, b2_ref, w3_ref, b3_ref,
                            w4_ref, b4_ref, w5_ref, b5_ref,
                            o_ref):
    """One batch tile: x [TB, D] (bf16) -> softmax probabilities [TB, NPAD]."""
    x = x_ref[...]

    # fc1 + ReLU (f32 accum / epilogue, bf16-staged activation)
    h = jnp.dot(x, w1_ref[...], preferred_element_type=jnp.float32) + b1_ref[...]
    h = jnp.maximum(h, 0.0).astype(jnp.bfloat16)

    # fc2 + ReLU
    h = jnp.dot(h, w2_ref[...], preferred_element_type=jnp.float32) + b2_ref[...]
    h = jnp.maximum(h, 0.0).astype(jnp.bfloat16)

    # dropout1 (p=0.1) -> identity in eval mode

    # fc3 + ReLU
    h = jnp.dot(h, w3_ref[...], preferred_element_type=jnp.float32) + b3_ref[...]
    h = jnp.maximum(h, 0.0).astype(jnp.bfloat16)

    # fc4 + ReLU (outputs zero-padded to 128 lanes; padded lanes stay exactly 0)
    h = jnp.dot(h, w4_ref[...], preferred_element_type=jnp.float32) + b4_ref[...]
    h = jnp.maximum(h, 0.0).astype(jnp.bfloat16)

    # fc5 (output lane-padded to 128; padded columns carry bias = -1e30)
    logits = jnp.dot(h, w5_ref[...], preferred_element_type=jnp.float32) + b5_ref[...]

    # softmax(dim=1); padded logits are -1e30 so their exp underflows to exactly 0.
    m = jnp.max(logits, axis=-1, keepdims=True)
    e = jnp.exp(logits - m)
    o_ref[...] = (e / jnp.sum(e, axis=-1, keepdims=True)).astype(o_ref.dtype)


def _round_up(v, m):
    return (v + m - 1) // m * m


def fcnet_classifier_forward(x, params, *, tb=1024, out_dtype=jnp.float32):
    """x: [B, input_size] (or any [B, ...] flattening to input_size).
    Returns softmax probabilities [B, num_classes] in `out_dtype`."""
    if x.ndim > 2:
        x = x.reshape(x.shape[0], -1)
    B, D = x.shape

    (w1, b1, w2, b2, w3, b3, w4, b4, w5, b5) = params
    num_classes = w5.shape[1]

    # --- zero-pad fc4 to 128 output lanes (exact: ReLU(0)=0, zero w5 rows add 0) ---
    H4 = w4.shape[1]
    H4P = _round_up(H4, 128)
    if H4P != H4:
        w4 = jnp.pad(w4, ((0, 0), (0, H4P - H4)))
        b4 = jnp.pad(b4.astype(jnp.float32), ((0, H4P - H4),))
        w5 = jnp.pad(w5, ((0, H4P - H4), (0, 0)))

    # --- lane-dense output: pad fc5 to a multiple of 128 columns ---
    NP = _round_up(num_classes, 128)
    if NP != num_classes:
        w5 = jnp.pad(w5, ((0, 0), (0, NP - num_classes)))
        b5 = jnp.concatenate(
            [b5.astype(jnp.float32),
             jnp.full((NP - num_classes,), -1e30, jnp.float32)])

    # bf16 matmul inputs (single cast — no extra f32 pass, no batch padding);
    # biases stay f32 for the epilogue.
    xb = x.astype(jnp.bfloat16)
    wb = [w.astype(jnp.bfloat16) for w in (w1, w2, w3, w4, w5)]
    bb = [b.astype(jnp.float32).reshape(1, -1) for b in (b1, b2, b3, b4, b5)]

    # --- batch tiling: large TB amortizes per-step overhead; cap so the grid has
    #     >=2 steps (v7x megacore) whenever B allows it. Last block may be ragged;
    #     out-of-range rows are masked on write.
    TB = _round_up(min(tb, B), 8)
    if B > 8 and pl.cdiv(B, TB) < 2:
        TB = _round_up(pl.cdiv(B, 2), 8)
    grid = (pl.cdiv(B, TB),)

    resident = lambda shape: pl.BlockSpec(shape, lambda i: (0, 0))  # VMEM-resident

    in_specs = [pl.BlockSpec((TB, D), lambda i: (i, 0))]
    for w, b in zip(wb, bb):
        in_specs.append(resident(w.shape))
        in_specs.append(resident(b.shape))

    out = pl.pallas_call(
        fcnet_classifier_kernel,
        out_shape=jax.ShapeDtypeStruct((B, NP), out_dtype),
        grid=grid,
        in_specs=in_specs,
        out_specs=pl.BlockSpec((TB, NP), lambda i: (i, 0)),
        compiler_params=pltpu.CompilerParams(
            dimension_semantics=("parallel",),
            vmem_limit_bytes=32 << 20),
    )(xb, wb[0], bb[0], wb[1], bb[1], wb[2], bb[2], wb[3], bb[3], wb[4], bb[4])

    return out[:, :num_classes]


def init_params(key, input_size, num_classes):
    """Deterministic init matching FCNetClassifier.__init__ Linear shapes.
    Weights stored as (in, out) = PyTorch weight.T."""
    dims = [input_size, 512, 256, 128, 64, num_classes]
    ks = jax.random.split(key, 2 * (len(dims) - 1))
    params = []
    for li, (fi, fo) in enumerate(zip(dims[:-1], dims[1:])):
        bound = 1.0 / jnp.sqrt(fi)
        w = jax.random.uniform(ks[2 * li], (fi, fo), jnp.float32, -bound, bound)
        b = jax.random.uniform(ks[2 * li + 1], (fo,), jnp.float32, -bound, bound)
        params += [w, b]
    return tuple(params)


def fcnet_classifier_reference(x, params):
    """Pure-JAX f32 reference of the same forward (eval mode)."""
    x = x.astype(jnp.float32).reshape(x.shape[0], -1)
    (w1, b1, w2, b2, w3, b3, w4, b4, w5, b5) = params
    h = jnp.maximum(x @ w1 + b1, 0.0)
    h = jnp.maximum(h @ w2 + b2, 0.0)
    # dropout1 -> identity in eval mode
    h = jnp.maximum(h @ w3 + b3, 0.0)
    h = jnp.maximum(h @ w4 + b4, 0.0)
    logits = h @ w5 + b5
    return jax.nn.softmax(logits, axis=-1)


if __name__ == "__main__":
    key = jax.random.PRNGKey(0)
    B, input_size, num_classes = 16, 256, 10

    kx, kp = jax.random.split(key)
    x = jax.random.normal(kx, (B, input_size), jnp.float32)
    params = init_params(kp, input_size, num_classes)

    out = jax.block_until_ready(fcnet_classifier_forward(x, params))
    ref = jax.block_until_ready(fcnet_classifier_reference(x, params))

    assert out.shape == (B, num_classes)
    assert jnp.allclose(out.sum(axis=-1), 1.0, atol=1e-3)
    assert jnp.allclose(out, ref, atol=2e-2, rtol=2e-2)
    print("KERNEL_OK")
</pallas_src>

<mosaic_0001>
module attributes {stable_mosaic.version = 11 : i64} {
  func.func @fcnet_classifier_kernel(%arg0: i32, %arg1: memref<8x256xbf16, #tpu.memory_space<vmem>>, %arg2: memref<256x512xbf16, #tpu.memory_space<vmem>>, %arg3: memref<1x512xf32, #tpu.memory_space<vmem>>, %arg4: memref<512x256xbf16, #tpu.memory_space<vmem>>, %arg5: memref<1x256xf32, #tpu.memory_space<vmem>>, %arg6: memref<256x128xbf16, #tpu.memory_space<vmem>>, %arg7: memref<1x128xf32, #tpu.memory_space<vmem>>, %arg8: memref<128x128xbf16, #tpu.memory_space<vmem>>, %arg9: memref<1x128xf32, #tpu.memory_space<vmem>>, %arg10: memref<128x128xbf16, #tpu.memory_space<vmem>>, %arg11: memref<1x128xf32, #tpu.memory_space<vmem>>, %arg12: memref<8x128xf32, #tpu.memory_space<vmem>>) attributes {dimension_semantics = [#tpu.dimension_semantics<parallel>], iteration_bounds = array<i64: 2>, scalar_prefetch = 0 : i64, scratch_operands = 0 : i64, tpu.core_type = #tpu.core_type<tc>, window_params = [{transform_indices = @transform_0, window_bounds = array<i64: 8, 256>}, {pipeline_mode = #tpu.pipeline_mode<synchronous>, transform_indices = @transform_1, window_bounds = array<i64: 256, 512>}, {pipeline_mode = #tpu.pipeline_mode<synchronous>, transform_indices = @transform_2, window_bounds = array<i64: 1, 512>}, {pipeline_mode = #tpu.pipeline_mode<synchronous>, transform_indices = @transform_3, window_bounds = array<i64: 512, 256>}, {pipeline_mode = #tpu.pipeline_mode<synchronous>, transform_indices = @transform_4, window_bounds = array<i64: 1, 256>}, {pipeline_mode = #tpu.pipeline_mode<synchronous>, transform_indices = @transform_5, window_bounds = array<i64: 256, 128>}, {pipeline_mode = #tpu.pipeline_mode<synchronous>, transform_indices = @transform_6, window_bounds = array<i64: 1, 128>}, {pipeline_mode = #tpu.pipeline_mode<synchronous>, transform_indices = @transform_7, window_bounds = array<i64: 128, 128>}, {pipeline_mode = #tpu.pipeline_mode<synchronous>, transform_indices = @transform_8, window_bounds = array<i64: 1, 128>}, {pipeline_mode = #tpu.pipeline_mode<synchronous>, transform_indices = @transform_9, window_bounds = array<i64: 128, 128>}, {pipeline_mode = #tpu.pipeline_mode<synchronous>, transform_indices = @transform_10, window_bounds = array<i64: 1, 128>}, {transform_indices = @transform_11, window_bounds = array<i64: 8, 128>}]} {
    %c0 = arith.constant 0 : index
    %c0_0 = arith.constant 0 : index
    %0 = vector.load %arg1[%c0, %c0_0] : memref<8x256xbf16, #tpu.memory_space<vmem>>, vector<8x256xbf16>
    %c0_1 = arith.constant 0 : index
    %c0_2 = arith.constant 0 : index
    %1 = vector.load %arg2[%c0_1, %c0_2] : memref<256x512xbf16, #tpu.memory_space<vmem>>, vector<256x512xbf16>
    %cst = arith.constant dense<0.000000e+00> : vector<8x512xf32>
    %2 = tpu.matmul %0, %1, %cst {dimension_numbers = #tpu.dot_dimension_numbers<[1], [0], [0], [1], [0, 0, 1, 1], [], []>} : vector<8x256xbf16>, vector<256x512xbf16>, vector<8x512xf32> -> vector<8x512xf32>
    %c0_3 = arith.constant 0 : index
    %c0_4 = arith.constant 0 : index
    %3 = vector.load %arg3[%c0_3, %c0_4] : memref<1x512xf32, #tpu.memory_space<vmem>>, vector<1x512xf32>
    %4 = vector.broadcast %3 : vector<1x512xf32> to vector<8x512xf32>
    %5 = arith.addf %2, %4 : vector<8x512xf32>
    %cst_5 = arith.constant 0.000000e+00 : f32
    %6 = vector.broadcast %cst_5 : f32 to vector<8x512xf32>
    %7 = arith.maximumf %5, %6 : vector<8x512xf32>
    %8 = arith.truncf %7 : vector<8x512xf32> to vector<8x512xbf16>
    %c0_6 = arith.constant 0 : index
    %c0_7 = arith.constant 0 : index
    %9 = vector.load %arg4[%c0_6, %c0_7] : memref<512x256xbf16, #tpu.memory_space<vmem>>, vector<512x256xbf16>
    %cst_8 = arith.constant dense<0.000000e+00> : vector<8x256xf32>
    %10 = tpu.matmul %8, %9, %cst_8 {dimension_numbers = #tpu.dot_dimension_numbers<[1], [0], [0], [1], [0, 0, 1, 1], [], []>} : vector<8x512xbf16>, vector<512x256xbf16>, vector<8x256xf32> -> vector<8x256xf32>
    %c0_9 = arith.constant 0 : index
    %c0_10 = arith.constant 0 : index
    %11 = vector.load %arg5[%c0_9, %c0_10] : memref<1x256xf32, #tpu.memory_space<vmem>>, vector<1x256xf32>
    %12 = vector.broadcast %11 : vector<1x256xf32> to vector<8x256xf32>
    %13 = arith.addf %10, %12 : vector<8x256xf32>
    %cst_11 = arith.constant 0.000000e+00 : f32
    %14 = vector.broadcast %cst_11 : f32 to vector<8x256xf32>
    %15 = arith.maximumf %13, %14 : vector<8x256xf32>
    %16 = arith.truncf %15 : vector<8x256xf32> to vector<8x256xbf16>
    %c0_12 = arith.constant 0 : index
    %c0_13 = arith.constant 0 : index
    %17 = vector.load %arg6[%c0_12, %c0_13] : memref<256x128xbf16, #tpu.memory_space<vmem>>, vector<256x128xbf16>
    %cst_14 = arith.constant dense<0.000000e+00> : vector<8x128xf32>
    %18 = tpu.matmul %16, %17, %cst_14 {dimension_numbers = #tpu.dot_dimension_numbers<[1], [0], [0], [1], [0, 0, 1, 1], [], []>} : vector<8x256xbf16>, vector<256x128xbf16>, vector<8x128xf32> -> vector<8x128xf32>
    %c0_15 = arith.constant 0 : index
    %c0_16 = arith.constant 0 : index
    %19 = vector.load %arg7[%c0_15, %c0_16] : memref<1x128xf32, #tpu.memory_space<vmem>>, vector<1x128xf32>
    %20 = vector.broadcast %19 : vector<1x128xf32> to vector<8x128xf32>
    %21 = arith.addf %18, %20 : vector<8x128xf32>
    %cst_17 = arith.constant 0.000000e+00 : f32
    %22 = vector.broadcast %cst_17 : f32 to vector<8x128xf32>
    %23 = arith.maximumf %21, %22 : vector<8x128xf32>
    %24 = arith.truncf %23 : vector<8x128xf32> to vector<8x128xbf16>
    %c0_18 = arith.constant 0 : index
    %c0_19 = arith.constant 0 : index
    %25 = vector.load %arg8[%c0_18, %c0_19] : memref<128x128xbf16, #tpu.memory_space<vmem>>, vector<128x128xbf16>
    %cst_20 = arith.constant dense<0.000000e+00> : vector<8x128xf32>
    %26 = tpu.matmul %24, %25, %cst_20 {dimension_numbers = #tpu.dot_dimension_numbers<[1], [0], [0], [1], [0, 0, 1, 1], [], []>} : vector<8x128xbf16>, vector<128x128xbf16>, vector<8x128xf32> -> vector<8x128xf32>
    %c0_21 = arith.constant 0 : index
    %c0_22 = arith.constant 0 : index
    %27 = vector.load %arg9[%c0_21, %c0_22] : memref<1x128xf32, #tpu.memory_space<vmem>>, vector<1x128xf32>
    %28 = vector.broadcast %27 : vector<1x128xf32> to vector<8x128xf32>
    %29 = arith.addf %26, %28 : vector<8x128xf32>
    %cst_23 = arith.constant 0.000000e+00 : f32
    %30 = vector.broadcast %cst_23 : f32 to vector<8x128xf32>
    %31 = arith.maximumf %29, %30 : vector<8x128xf32>
    %32 = arith.truncf %31 : vector<8x128xf32> to vector<8x128xbf16>
    %c0_24 = arith.constant 0 : index
    %c0_25 = arith.constant 0 : index
    %33 = vector.load %arg10[%c0_24, %c0_25] : memref<128x128xbf16, #tpu.memory_space<vmem>>, vector<128x128xbf16>
    %cst_26 = arith.constant dense<0.000000e+00> : vector<8x128xf32>
    %34 = tpu.matmul %32, %33, %cst_26 {dimension_numbers = #tpu.dot_dimension_numbers<[1], [0], [0], [1], [0, 0, 1, 1], [], []>} : vector<8x128xbf16>, vector<128x128xbf16>, vector<8x128xf32> -> vector<8x128xf32>
    %c0_27 = arith.constant 0 : index
    %c0_28 = arith.constant 0 : index
    %35 = vector.load %arg11[%c0_27, %c0_28] : memref<1x128xf32, #tpu.memory_space<vmem>>, vector<1x128xf32>
    %36 = vector.broadcast %35 : vector<1x128xf32> to vector<8x128xf32>
    %37 = arith.addf %34, %36 : vector<8x128xf32>
    %cst_29 = arith.constant dense<0xFF800000> : vector<8xf32>
    %38 = vector.multi_reduction <maximumf>, %37, %cst_29 [1] : vector<8x128xf32> to vector<8xf32>
    %39 = vector.shape_cast %38 : vector<8xf32> to vector<8x1xf32>
    %40 = vector.broadcast %39 : vector<8x1xf32> to vector<8x128xf32>
    %41 = arith.subf %37, %40 : vector<8x128xf32>
    %42 = math.exp %41 : vector<8x128xf32>
    %cst_30 = arith.constant dense<0.000000e+00> : vector<8xf32>
    %43 = vector.multi_reduction <add>, %42, %cst_30 [1] : vector<8x128xf32> to vector<8xf32>
    %44 = vector.shape_cast %43 : vector<8xf32> to vector<8x1xf32>
    %45 = vector.broadcast %44 : vector<8x1xf32> to vector<8x128xf32>
    %46 = arith.divf %42, %45 : vector<8x128xf32>
    %c0_31 = arith.constant 0 : index
    %c0_32 = arith.constant 0 : index
    %47 = vector.load %arg12[%c0_31, %c0_32] : memref<8x128xf32, #tpu.memory_space<vmem>>, vector<8x128xf32>
    tpu.vector_store %arg12[%c0_31, %c0_32], %46 {strides = array<i32>} : memref<8x128xf32, #tpu.memory_space<vmem>>, vector<8x128xf32>,
    return
  }
  func.func @transform_0(%arg0: i32) -> (i32, i32) {
    %c0_i32 = arith.constant 0 : i32
    %c0_i32_0 = arith.constant 0 : i32
    return %arg0, %c0_i32 : i32, i32
  }
  func.func @transform_1(%arg0: i32) -> (i32, i32) {
    %c0_i32 = arith.constant 0 : i32
    %c0_i32_0 = arith.constant 0 : i32
    %c0_i32_1 = arith.constant 0 : i32
    return %c0_i32, %c0_i32_0 : i32, i32
  }
  func.func @transform_2(%arg0: i32) -> (i32, i32) {
    %c0_i32 = arith.constant 0 : i32
    %c0_i32_0 = arith.constant 0 : i32
    %c0_i32_1 = arith.constant 0 : i32
    return %c0_i32, %c0_i32_0 : i32, i32
  }
  func.func @transform_3(%arg0: i32) -> (i32, i32) {
    %c0_i32 = arith.constant 0 : i32
    %c0_i32_0 = arith.constant 0 : i32
    %c0_i32_1 = arith.constant 0 : i32
    return %c0_i32, %c0_i32_0 : i32, i32
  }
  func.func @transform_4(%arg0: i32) -> (i32, i32) {
    %c0_i32 = arith.constant 0 : i32
    %c0_i32_0 = arith.constant 0 : i32
    %c0_i32_1 = arith.constant 0 : i32
    return %c0_i32, %c0_i32_0 : i32, i32
  }
  func.func @transform_5(%arg0: i32) -> (i32, i32) {
    %c0_i32 = arith.constant 0 : i32
    %c0_i32_0 = arith.constant 0 : i32
    %c0_i32_1 = arith.constant 0 : i32
    return %c0_i32, %c0_i32_0 : i32, i32
  }
  func.func @transform_6(%arg0: i32) -> (i32, i32) {
    %c0_i32 = arith.constant 0 : i32
    %c0_i32_0 = arith.constant 0 : i32
    %c0_i32_1 = arith.constant 0 : i32
    return %c0_i32, %c0_i32_0 : i32, i32
  }
  func.func @transform_7(%arg0: i32) -> (i32, i32) {
    %c0_i32 = arith.constant 0 : i32
    %c0_i32_0 = arith.constant 0 : i32
    %c0_i32_1 = arith.constant 0 : i32
    return %c0_i32, %c0_i32_0 : i32, i32
  }
  func.func @transform_8(%arg0: i32) -> (i32, i32) {
    %c0_i32 = arith.constant 0 : i32
    %c0_i32_0 = arith.constant 0 : i32
    %c0_i32_1 = arith.constant 0 : i32
    return %c0_i32, %c0_i32_0 : i32, i32
  }
  func.func @transform_9(%arg0: i32) -> (i32, i32) {
    %c0_i32 = arith.constant 0 : i32
    %c0_i32_0 = arith.constant 0 : i32
    %c0_i32_1 = arith.constant 0 : i32
    return %c0_i32, %c0_i32_0 : i32, i32
  }
  func.func @transform_10(%arg0: i32) -> (i32, i32) {
    %c0_i32 = arith.constant 0 : i32
    %c0_i32_0 = arith.constant 0 : i32
    %c0_i32_1 = arith.constant 0 : i32
    return %c0_i32, %c0_i32_0 : i32, i32
  }
  func.func @transform_11(%arg0: i32) -> (i32, i32) {
    %c0_i32 = arith.constant 0 : i32
    %c0_i32_0 = arith.constant 0 : i32
    return %arg0, %c0_i32 : i32, i32
  }
}

</mosaic_0001>

<llo_original>
// kernel: tpu_custom_call.1
$region0: #{tpu_custom_call.1}
  #allocation0 [shape = 'u32[]', space=smem, size = 0x4, offset = 0x4, fixed_abs, tag = 'smem constant byte address 0x4 - core index']
  #allocation1 [shape = 'u32[144,128]{1,0:T(1,128)}', space=vmem, size = 0x12000, scoped, tag = 'internal scratch']
  %s0 = inlined_call_operand.hbm [shape: bf16[16,256], index: 0, kind: input, shape index: {}]
  %s1 = inlined_call_operand.hbm [shape: bf16[256,512], index: 1, kind: input, shape index: {}]
  %s2 = inlined_call_operand.vmem [shape: f32[1,512], index: 2, kind: input, shape index: {}]
  %s3 = inlined_call_operand.hbm [shape: bf16[512,256], index: 3, kind: input, shape index: {}]
  %s4 = inlined_call_operand.vmem [shape: f32[1,256], index: 4, kind: input, shape index: {}]
  %s5 = inlined_call_operand.hbm [shape: bf16[256,128], index: 5, kind: input, shape index: {}]
  %s6 = inlined_call_operand.vmem [shape: f32[1,128], index: 6, kind: input, shape index: {}]
  %s7 = inlined_call_operand.hbm [shape: bf16[128,128], index: 7, kind: input, shape index: {}]
  %s8 = inlined_call_operand.vmem [shape: f32[1,128], index: 8, kind: input, shape index: {}]
  %s9 = inlined_call_operand.hbm [shape: bf16[128,128], index: 9, kind: input, shape index: {}]
  %s10 = inlined_call_operand.vmem [shape: f32[1,128], index: 10, kind: input, shape index: {}]
  %s11 = inlined_call_operand.hbm [shape: f32[16,128], index: 11, kind: output, shape index: {}]
  %s12 = sld [smem:[#allocation0]]
  $region101: #{tpu_custom_call.1} parent=0
    _
  %s14 = ssub.s32 1, %s12
  %s15 = scalar_select 0, %s14, %s12
  $region1: #{tpu_custom_call.1} parent=0
    #allocation2 [shape = 'u8[8192]{0}', space=vmem, size = 0x2000, scoped, tag = 'input window, operand 0']
    #allocation3 [shape = 's32[2]{0}', space=sflag, size = 0x8, scoped, tag = 'scoped memory for tpu_custom_call.1']
    #allocation4 [shape = 's32[2]{0}', space=sflag, size = 0x8, scoped, tag = 'scoped memory for tpu_custom_call.1']
    #allocation5 [shape = 'u8[262144]{0}', space=vmem, size = 0x40000, scoped, tag = 'input window, operand 1, single buffered']
    #allocation6 [shape = 's32[1]{0}', space=sflag, size = 0x4, scoped, tag = 'scoped memory for tpu_custom_call.1']
    #allocation7 [shape = 'u8[262144]{0}', space=vmem, size = 0x40000, scoped, tag = 'input window, operand 3, single buffered']
    #allocation8 [shape = 'u8[65536]{0}', space=vmem, size = 0x10000, scoped, tag = 'input window, operand 5, single buffered']
    #allocation9 [shape = 's32[1]{0}', space=sflag, size = 0x4, scoped, tag = 'scoped memory for tpu_custom_call.1']
    #allocation10 [shape = 'u8[32768]{0}', space=vmem, size = 0x8000, scoped, tag = 'input window, operand 7, single buffered']
    #allocation11 [shape = 'u8[32768]{0}', space=vmem, size = 0x8000, scoped, tag = 'input window, operand 9, single buffered']
    #allocation12 [shape = 's32[1]{0}', space=sflag, size = 0x4, scoped, tag = 'scoped memory for tpu_custom_call.1']
    #allocation13 [shape = 'u8[8192]{0}', space=vmem, size = 0x2000, scoped, tag = 'output window, operand 0']
    %16 = vsyncpa [#allocation3], 0
    %s17 = scalar_lea.sflag [#allocation3], 1
    %18 = vsyncpa %s17, 0
    %19 = vsyncpa [#allocation6], 0
    %20 = vsyncpa [#allocation9], 0
    %21 = vsyncpa [#allocation12], 0
    %22 = vsyncpa [#allocation4], 0
    %s23 = scalar_lea.sflag [#allocation4], 1
    %24 = vsyncpa %s23, 0
    loop: start=0, step=1, limit=4
    $region2: #{tpu_custom_call.1} parent=1 // loop_pre_header
      _
    $region3: #{tpu_custom_call.1} parent=1 // loop_header
      %s26 = sphi 0, %s30
      %p27 = scmp.ge.s32.totalorder %s26, 4
      %s36 = sphi 0, %s38
      %s39 = sphi 0, %s36
      %s40 = sphi 0, %s39
      %s56 = sphi 0, %s40
      %s60 = sphi 0, %s60
      %s62 = sphi 0, %s60
      %s63 = sphi 0, %s62
      %s77 = sphi 0, %s63
      %s81 = sphi 0, %s81
      %s83 = sphi 0, %s81
      %s84 = sphi 0, %s83
      %s98 = sphi 0, %s84
      %s102 = sphi 0, %s102
      %s104 = sphi 0, %s102
      %s105 = sphi 0, %s104
      %s119 = sphi 0, %s105
      %s123 = sphi 0, %s123
      %s125 = sphi 0, %s123
      %s126 = sphi 0, %s125
      %s140 = sphi 0, %s126
      %s144 = sphi 0, %s144
      %s146 = sphi 0, %s144
      %s147 = sphi 0, %s146
      %s161 = sphi 0, %s147
      %s165 = sphi 0, %s165
      %s167 = sphi 0, %s165
      %s168 = sphi 0, %s167
      %s182 = sphi 0, %s168
      %s186 = sphi 0, %s186
      %s188 = sphi 0, %s186
      %s189 = sphi 0, %s188
      %s203 = sphi 0, %s189
      %s207 = sphi 0, %s207
      %s209 = sphi 0, %s207
      %s210 = sphi 0, %s209
      %s224 = sphi 0, %s210
      %s228 = sphi 0, %s228
      %s230 = sphi 0, %s228
      %s231 = sphi 0, %s230
      %s245 = sphi 0, %s231
      %s249 = sphi 0, %s249
      %s251 = sphi 0, %s249
      %s252 = sphi 0, %s251
      %s266 = sphi 0, %s252
      %s272 = sphi 0, %s274
      %s275 = sphi 0, %s272
      %s276 = sphi 0, %s275
      %s292 = sphi 0, %s276
    $region4: #{tpu_custom_call.1} parent=1 // loop_header_branch
      %29 = sbr.rel (%p27) target = $region8
    $region5: #{tpu_custom_call.1} parent=1 // loop_body
      %s31 = ssub.s32 %s26, 1
      %s32 = ssub.s32 %s26, 2
      %s33 = sadd.s32 %s26, 1
      %s34 = ssub.s32 %s26, %s33
      %p35 = scmp.eq.s32.totalorder %s34, 0
      %s37 = sadd.s32 %s36, 1
      %s38 = scalar_select %p35, %s36, %s37
      %p41 = pneg %p35
      %p42 = scmp.eq.s32.totalorder %s26, 1
      %p43 = por %p41, %p42
      %p44 = scmp.ne.s32.totalorder %s36, %s39
      %p45 = scmp.eq.s32.totalorder %s26, 0
      %p46 = por %p44, %p45
      %p47 = scmp.ne.s32.totalorder %s36, %s39
      %p48 = scmp.eq.s32.totalorder %s31, 1
      %p49 = por %p47, %p48
      %p50 = scmp.ne.s32.totalorder %s39, %s40
      %p51 = scmp.eq.s32.totalorder %s31, 0
      %p52 = por %p50, %p51
      %p53 = scmp.ne.s32.totalorder %s39, %s40
      %p54 = scmp.eq.s32.totalorder %s32, 1
      %p55 = por %p53, %p54
      %p57 = scmp.ne.s32.totalorder %s40, %s56
      %p58 = scmp.eq.s32.totalorder %s32, 0
      %p59 = por %p57, %p58
      %s61 = sadd.s32 %s60, 1
      %p64 = scmp.eq.s32.totalorder %s26, 1
      %p65 = scmp.ne.s32.totalorder %s60, %s62
      %p66 = scmp.eq.s32.totalorder %s26, 0
      %p67 = por %p65, %p66
      %p68 = scmp.ne.s32.totalorder %s60, %s62
      %p69 = scmp.eq.s32.totalorder %s31, 1
      %p70 = por %p68, %p69
      %p71 = scmp.ne.s32.totalorder %s62, %s63
      %p72 = scmp.eq.s32.totalorder %s31, 0
      %p73 = por %p71, %p72
      %p74 = scmp.ne.s32.totalorder %s62, %s63
      %p75 = scmp.eq.s32.totalorder %s32, 1
      %p76 = por %p74, %p75
      %p78 = scmp.ne.s32.totalorder %s63, %s77
      %p79 = scmp.eq.s32.totalorder %s32, 0
      %p80 = por %p78, %p79
      %s82 = sadd.s32 %s81, 1
      %p85 = scmp.eq.s32.totalorder %s26, 1
      %p86 = scmp.ne.s32.totalorder %s81, %s83
      %p87 = scmp.eq.s32.totalorder %s26, 0
      %p88 = por %p86, %p87
      %p89 = scmp.ne.s32.totalorder %s81, %s83
      %p90 = scmp.eq.s32.totalorder %s31, 1
      %p91 = por %p89, %p90
      %p92 = scmp.ne.s32.totalorder %s83, %s84
      %p93 = scmp.eq.s32.totalorder %s31, 0
      %p94 = por %p92, %p93
      %p95 = scmp.ne.s32.totalorder %s83, %s84
      %p96 = scmp.eq.s32.totalorder %s32, 1
      %p97 = por %p95, %p96
      %p99 = scmp.ne.s32.totalorder %s84, %s98
      %p100 = scmp.eq.s32.totalorder %s32, 0
      %p101 = por %p99, %p100
      %s103 = sadd.s32 %s102, 1
      %p106 = scmp.eq.s32.totalorder %s26, 1
      %p107 = scmp.ne.s32.totalorder %s102, %s104
      %p108 = scmp.eq.s32.totalorder %s26, 0
      %p109 = por %p107, %p108
      %p110 = scmp.ne.s32.totalorder %s102, %s104
      %p111 = scmp.eq.s32.totalorder %s31, 1
      %p112 = por %p110, %p111
      %p113 = scmp.ne.s32.totalorder %s104, %s105
      %p114 = scmp.eq.s32.totalorder %s31, 0
      %p115 = por %p113, %p114
      %p116 = scmp.ne.s32.totalorder %s104, %s105
      %p117 = scmp.eq.s32.totalorder %s32, 1
      %p118 = por %p116, %p117
      %p120 = scmp.ne.s32.totalorder %s105, %s119
      %p121 = scmp.eq.s32.totalorder %s32, 0
      %p122 = por %p120, %p121
      %s124 = sadd.s32 %s123, 1
      %p127 = scmp.eq.s32.totalorder %s26, 1
      %p128 = scmp.ne.s32.totalorder %s123, %s125
      %p129 = scmp.eq.s32.totalorder %s26, 0
      %p130 = por %p128, %p129
      %p131 = scmp.ne.s32.totalorder %s123, %s125
      %p132 = scmp.eq.s32.totalorder %s31, 1
      %p133 = por %p131, %p132
      %p134 = scmp.ne.s32.totalorder %s125, %s126
      %p135 = scmp.eq.s32.totalorder %s31, 0
      %p136 = por %p134, %p135
      %p137 = scmp.ne.s32.totalorder %s125, %s126
      %p138 = scmp.eq.s32.totalorder %s32, 1
      %p139 = por %p137, %p138
      %p141 = scmp.ne.s32.totalorder %s126, %s140
      %p142 = scmp.eq.s32.totalorder %s32, 0
      %p143 = por %p141, %p142
      %s145 = sadd.s32 %s144, 1
      %p148 = scmp.eq.s32.totalorder %s26, 1
      %p149 = scmp.ne.s32.totalorder %s144, %s146
      %p150 = scmp.eq.s32.totalorder %s26, 0
      %p151 = por %p149, %p150
      %p152 = scmp.ne.s32.totalorder %s144, %s146
      %p153 = scmp.eq.s32.totalorder %s31, 1
      %p154 = por %p152, %p153
      %p155 = scmp.ne.s32.totalorder %s146, %s147
      %p156 = scmp.eq.s32.totalorder %s31, 0
      %p157 = por %p155, %p156
      %p158 = scmp.ne.s32.totalorder %s146, %s147
      %p159 = scmp.eq.s32.totalorder %s32, 1
      %p160 = por %p158, %p159
      %p162 = scmp.ne.s32.totalorder %s147, %s161
      %p163 = scmp.eq.s32.totalorder %s32, 0
      %p164 = por %p162, %p163
      %s166 = sadd.s32 %s165, 1
      %p169 = scmp.eq.s32.totalorder %s26, 1
      %p170 = scmp.ne.s32.totalorder %s165, %s167
      %p171 = scmp.eq.s32.totalorder %s26, 0
      %p172 = por %p170, %p171
      %p173 = scmp.ne.s32.totalorder %s165, %s167
      %p174 = scmp.eq.s32.totalorder %s31, 1
      %p175 = por %p173, %p174
      %p176 = scmp.ne.s32.totalorder %s167, %s168
      %p177 = scmp.eq.s32.totalorder %s31, 0
      %p178 = por %p176, %p177
      %p179 = scmp.ne.s32.totalorder %s167, %s168
      %p180 = scmp.eq.s32.totalorder %s32, 1
      %p181 = por %p179, %p180
      %p183 = scmp.ne.s32.totalorder %s168, %s182
      %p184 = scmp.eq.s32.totalorder %s32, 0
      %p185 = por %p183, %p184
      %s187 = sadd.s32 %s186, 1
      %p190 = scmp.eq.s32.totalorder %s26, 1
      %p191 = scmp.ne.s32.totalorder %s186, %s188
      %p192 = scmp.eq.s32.totalorder %s26, 0
      %p193 = por %p191, %p192
      %p194 = scmp.ne.s32.totalorder %s186, %s188
      %p195 = scmp.eq.s32.totalorder %s31, 1
      %p196 = por %p194, %p195
      %p197 = scmp.ne.s32.totalorder %s188, %s189
      %p198 = scmp.eq.s32.totalorder %s31, 0
      %p199 = por %p197, %p198
      %p200 = scmp.ne.s32.totalorder %s188, %s189
      %p201 = scmp.eq.s32.totalorder %s32, 1
      %p202 = por %p200, %p201
      %p204 = scmp.ne.s32.totalorder %s189, %s203
      %p205 = scmp.eq.s32.totalorder %s32, 0
      %p206 = por %p204, %p205
      %s208 = sadd.s32 %s207, 1
      %p211 = scmp.eq.s32.totalorder %s26, 1
      %p212 = scmp.ne.s32.totalorder %s207, %s209
      %p213 = scmp.eq.s32.totalorder %s26, 0
      %p214 = por %p212, %p213
      %p215 = scmp.ne.s32.totalorder %s207, %s209
      %p216 = scmp.eq.s32.totalorder %s31, 1
      %p217 = por %p215, %p216
      %p218 = scmp.ne.s32.totalorder %s209, %s210
      %p219 = scmp.eq.s32.totalorder %s31, 0
      %p220 = por %p218, %p219
      %p221 = scmp.ne.s32.totalorder %s209, %s210
      %p222 = scmp.eq.s32.totalorder %s32, 1
      %p223 = por %p221, %p222
      %p225 = scmp.ne.s32.totalorder %s210, %s224
      %p226 = scmp.eq.s32.totalorder %s32, 0
      %p227 = por %p225, %p226
      %s229 = sadd.s32 %s228, 1
      %p232 = scmp.eq.s32.totalorder %s26, 1
      %p233 = scmp.ne.s32.totalorder %s228, %s230
      %p234 = scmp.eq.s32.totalorder %s26, 0
      %p235 = por %p233, %p234
      %p236 = scmp.ne.s32.totalorder %s228, %s230
      %p237 = scmp.eq.s32.totalorder %s31, 1
      %p238 = por %p236, %p237
      %p239 = scmp.ne.s32.totalorder %s230, %s231
      %p240 = scmp.eq.s32.totalorder %s31, 0
      %p241 = por %p239, %p240
      %p242 = scmp.ne.s32.totalorder %s230, %s231
      %p243 = scmp.eq.s32.totalorder %s32, 1
      %p244 = por %p242, %p243
      %p246 = scmp.ne.s32.totalorder %s231, %s245
      %p247 = scmp.eq.s32.totalorder %s32, 0
      %p248 = por %p246, %p247
      %s250 = sadd.s32 %s249, 1
      %p253 = scmp.eq.s32.totalorder %s26, 1
      %p254 = scmp.ne.s32.totalorder %s249, %s251
      %p255 = scmp.eq.s32.totalorder %s26, 0
      %p256 = por %p254, %p255
      %p257 = scmp.ne.s32.totalorder %s249, %s251
      %p258 = scmp.eq.s32.totalorder %s31, 1
      %p259 = por %p257, %p258
      %p260 = scmp.ne.s32.totalorder %s251, %s252
      %p261 = scmp.eq.s32.totalorder %s31, 0
      %p262 = por %p260, %p261
      %p263 = scmp.ne.s32.totalorder %s251, %s252
      %p264 = scmp.eq.s32.totalorder %s32, 1
      %p265 = por %p263, %p264
      %p267 = scmp.ne.s32.totalorder %s252, %s266
      %p268 = scmp.eq.s32.totalorder %s32, 0
      %p269 = por %p267, %p268
      %s270 = ssub.s32 %s26, %s33
      %p271 = scmp.eq.s32.totalorder %s270, 0
      %s273 = sadd.s32 %s272, 1
      %s274 = scalar_select %p271, %s272, %s273
      %p277 = pneg %p271
      %p278 = scmp.eq.s32.totalorder %s26, 1
      %p279 = por %p277, %p278
      %p280 = scmp.ne.s32.totalorder %s272, %s275
      %p281 = scmp.eq.s32.totalorder %s26, 0
      %p282 = por %p280, %p281
      %p283 = scmp.ne.s32.totalorder %s272, %s275
      %p284 = scmp.eq.s32.totalorder %s31, 1
      %p285 = por %p283, %p284
      %p286 = scmp.ne.s32.totalorder %s275, %s276
      %p287 = scmp.eq.s32.totalorder %s31, 0
      %p288 = por %p286, %p287
      %p289 = scmp.ne.s32.totalorder %s275, %s276
      %p290 = scmp.eq.s32.totalorder %s32, 1
      %p291 = por %p289, %p290
      %p293 = scmp.ne.s32.totalorder %s276, %s292
      %p294 = scmp.eq.s32.totalorder %s32, 0
      %p295 = por %p293, %p294
      %p296 = scmp.le.s32.totalorder 1, %s26
      %p297 = scmp.lt.s32.totalorder %s26, 3
      %p298 = pnand %p296, %p297
      %p299 = pneg %p298
      // Predicated region
      $region9: #{tpu_custom_call.1} parent=5 // pred_check
        _
      $region10: #{tpu_custom_call.1} parent=5 // pred_check_branch
        %301 = sbr.rel (%p298) target = $region12
      $region11: #{tpu_custom_call.1} parent=5 // pred_region
        %s302 = ssub.s32 %s26, 1
        // Predicated region
        $region13: #{tpu_custom_call.1} parent=11 // pred_check
          %p303 = pneg %p73
        $region14: #{tpu_custom_call.1} parent=11 // pred_check_branch
          %305 = sbr.rel (%p303) target = $region16
        $region15: #{tpu_custom_call.1} parent=11 // pred_region
          %s307 = ssub.s32 8192, 8192
          %308 = vsyncadd [#allocation6], %s307
          %s309 = sshll.u32 [#allocation5], 4
          %s310 = int_to_ptr.vmem [resolvable:$true] %s309
          %315 = dma.hbm_to_vmem [thread:$0]  %s1, 8192, %s310, [#allocation6], 256, 256, 16
        $region16: #{tpu_custom_call.1} parent=11 // pred_fallthru
          _
        // Predicated region
        $region17: #{tpu_custom_call.1} parent=11 // pred_check
          %p316 = pneg %p94
        $region18: #{tpu_custom_call.1} parent=11 // pred_check_branch
          %318 = sbr.rel (%p316) target = $region20
        $region19: #{tpu_custom_call.1} parent=11 // pred_region
          _
        $region20: #{tpu_custom_call.1} parent=11 // pred_fallthru
          _
        // Predicated region
        $region21: #{tpu_custom_call.1} parent=11 // pred_check
          %p319 = pneg %p115
        $region22: #{tpu_custom_call.1} parent=11 // pred_check_branch
          %321 = sbr.rel (%p319) target = $region24
        $region23: #{tpu_custom_call.1} parent=11 // pred_region
          %s323 = ssub.s32 8192, 8192
          %324 = vsyncadd [#allocation6], %s323
          %s325 = sshll.u32 [#allocation7], 4
          %s326 = int_to_ptr.vmem [resolvable:$true] %s325
          %331 = dma.hbm_to_vmem [thread:$0]  %s3, 8192, %s326, [#allocation6], 128, 128, 8
        $region24: #{tpu_custom_call.1} parent=11 // pred_fallthru
          _
        // Predicated region
        $region25: #{tpu_custom_call.1} parent=11 // pred_check
          %p332 = pneg %p136
        $region26: #{tpu_custom_call.1} parent=11 // pred_check_branch
          %334 = sbr.rel (%p332) target = $region28
        $region27: #{tpu_custom_call.1} parent=11 // pred_region
          _
        $region28: #{tpu_custom_call.1} parent=11 // pred_fallthru
          _
        // Predicated region
        $region29: #{tpu_custom_call.1} parent=11 // pred_check
          %p335 = pneg %p157
        $region30: #{tpu_custom_call.1} parent=11 // pred_check_branch
          %337 = sbr.rel (%p335) target = $region32
        $region31: #{tpu_custom_call.1} parent=11 // pred_region
          %s339 = ssub.s32 2048, 2048
          %340 = vsyncadd [#allocation9], %s339
          %s341 = sshll.u32 [#allocation8], 4
          %s342 = int_to_ptr.vmem [resolvable:$true] %s341
          %347 = dma.hbm_to_vmem [thread:$0]  %s5, 2048, %s342, [#allocation9], 64, 64, 4
        $region32: #{tpu_custom_call.1} parent=11 // pred_fallthru
          _
        // Predicated region
        $region33: #{tpu_custom_call.1} parent=11 // pred_check
          %p348 = pneg %p178
        $region34: #{tpu_custom_call.1} parent=11 // pred_check_branch
          %350 = sbr.rel (%p348) target = $region36
        $region35: #{tpu_custom_call.1} parent=11 // pred_region
          _
        $region36: #{tpu_custom_call.1} parent=11 // pred_fallthru
          _
        // Predicated region
        $region37: #{tpu_custom_call.1} parent=11 // pred_check
          %p351 = pneg %p199
        $region38: #{tpu_custom_call.1} parent=11 // pred_check_branch
          %353 = sbr.rel (%p351) target = $region40
        $region39: #{tpu_custom_call.1} parent=11 // pred_region
          %s355 = ssub.s32 1024, 1024
          %356 = vsyncadd [#allocation9], %s355
          %s357 = sshll.u32 [#allocation10], 4
          %s358 = int_to_ptr.vmem [resolvable:$true] %s357
          %363 = dma.hbm_to_vmem [thread:$0]  %s7, 1024, %s358, [#allocation9], 64, 64, 4
        $region40: #{tpu_custom_call.1} parent=11 // pred_fallthru
          _
        // Predicated region
        $region41: #{tpu_custom_call.1} parent=11 // pred_check
          %p364 = pneg %p220
        $region42: #{tpu_custom_call.1} parent=11 // pred_check_branch
          %366 = sbr.rel (%p364) target = $region44
        $region43: #{tpu_custom_call.1} parent=11 // pred_region
          _
        $region44: #{tpu_custom_call.1} parent=11 // pred_fallthru
          _
        // Predicated region
        $region45: #{tpu_custom_call.1} parent=11 // pred_check
          %p367 = pneg %p241
        $region46: #{tpu_custom_call.1} parent=11 // pred_check_branch
          %369 = sbr.rel (%p367) target = $region48
        $region47: #{tpu_custom_call.1} parent=11 // pred_region
          %s371 = ssub.s32 1024, 1024
          %372 = vsyncadd [#allocation12], %s371
          %s373 = sshll.u32 [#allocation11], 4
          %s374 = int_to_ptr.vmem [resolvable:$true] %s373
          %379 = dma.hbm_to_vmem [thread:$0]  %s9, 1024, %s374, [#allocation12], 64, 64, 4
        $region48: #{tpu_custom_call.1} parent=11 // pred_fallthru
          _
        // Predicated region
        $region49: #{tpu_custom_call.1} parent=11 // pred_check
          %p380 = pneg %p262
        $region50: #{tpu_custom_call.1} parent=11 // pred_check_branch
          %382 = sbr.rel (%p380) target = $region52
        $region51: #{tpu_custom_call.1} parent=11 // pred_region
          _
        $region52: #{tpu_custom_call.1} parent=11 // pred_fallthru
          _
      $region12: #{tpu_custom_call.1} parent=5 // pred_fallthru
        _
      %p383 = scmp.lt.s32.totalorder %s26, 2
      // Predicated region
      $region53: #{tpu_custom_call.1} parent=5 // pred_check
        %p384 = pneg %p383
      $region54: #{tpu_custom_call.1} parent=5 // pred_check_branch
        %386 = sbr.rel (%p384) target = $region56
      $region55: #{tpu_custom_call.1} parent=5 // pred_region
        // Predicated region
        $region57: #{tpu_custom_call.1} parent=55 // pred_check
          %p387 = pneg %p46
        $region58: #{tpu_custom_call.1} parent=55 // pred_check_branch
          %389 = sbr.rel (%p387) target = $region60
        $region59: #{tpu_custom_call.1} parent=55 // pred_region
          %s390 = sand.u32 %s36, 1
          %s391 = scalar_lea.sflag [#allocation3], %s390
          %s392 = sand.u32 %s36, 1
          %s393 = smul.addr %s392, 8
          %s394 = scalar_lea.vmem [#allocation2], %s393
          %s396 = ssub.s32 128, 128
          %397 = vsyncadd %s391, %s396
          %s398 = smul.addr %s26, 2
          %s399 = smul.addr %s398, 64
          %s400 = scalar_lea.hbm %s0, %s399
          %s402 = sshll.u32 %s394, 4
          %s403 = int_to_ptr.vmem [resolvable:$true] %s402
          %405 = dma.hbm_to_vmem [thread:$0]  %s400, 128, %s403, %s391
        $region60: #{tpu_custom_call.1} parent=55 // pred_fallthru
          _
      $region56: #{tpu_custom_call.1} parent=5 // pred_fallthru
        _
      %p406 = scmp.le.s32.totalorder 1, %s26
      %p407 = scmp.lt.s32.totalorder %s26, 3
      %p408 = pnand %p406, %p407
      %p409 = pneg %p408
      // Predicated region
      $region61: #{tpu_custom_call.1} parent=5 // pred_check
        _
      $region62: #{tpu_custom_call.1} parent=5 // pred_check_branch
        %411 = sbr.rel (%p408) target = $region64
      $region63: #{tpu_custom_call.1} parent=5 // pred_region
        %s412 = ssub.s32 %s26, 1
        %s413 = sand.u32 %s39, 1
        %s414 = scalar_lea.sflag [#allocation3], %s413
        %s415 = sand.u32 %s39, 1
        %s416 = smul.addr %s415, 8
        %s417 = scalar_lea.vmem [#allocation2], %s416
        // Predicated region
        $region65: #{tpu_custom_call.1} parent=63 // pred_check
          %p418 = pneg %p52
        $region66: #{tpu_custom_call.1} parent=63 // pred_check_branch
          %420 = sbr.rel (%p418) target = $region68
        $region67: #{tpu_custom_call.1} parent=63 // pred_region
          %421 = dma.done %s414, 128
        $region68: #{tpu_custom_call.1} parent=63 // pred_fallthru
          _
        // Predicated region
        $region69: #{tpu_custom_call.1} parent=63 // pred_check
          %p422 = pneg %p73
        $region70: #{tpu_custom_call.1} parent=63 // pred_check_branch
          %424 = sbr.rel (%p422) target = $region72
        $region71: #{tpu_custom_call.1} parent=63 // pred_region
          %425 = dma.done [#allocation6], 8192
        $region72: #{tpu_custom_call.1} parent=63 // pred_fallthru
          _
        // Predicated region
        $region73: #{tpu_custom_call.1} parent=63 // pred_check
          %p426 = pneg %p115
        $region74: #{tpu_custom_call.1} parent=63 // pred_check_branch
          %428 = sbr.rel (%p426) target = $region76
        $region75: #{tpu_custom_call.1} parent=63 // pred_region
          %429 = dma.done [#allocation6], 8192
        $region76: #{tpu_custom_call.1} parent=63 // pred_fallthru
          _
        // Predicated region
        $region77: #{tpu_custom_call.1} parent=63 // pred_check
          %p430 = pneg %p157
        $region78: #{tpu_custom_call.1} parent=63 // pred_check_branch
          %432 = sbr.rel (%p430) target = $region80
        $region79: #{tpu_custom_call.1} parent=63 // pred_region
          %433 = dma.done [#allocation9], 2048
        $region80: #{tpu_custom_call.1} parent=63 // pred_fallthru
          _
        // Predicated region
        $region81: #{tpu_custom_call.1} parent=63 // pred_check
          %p434 = pneg %p199
        $region82: #{tpu_custom_call.1} parent=63 // pred_check_branch
          %436 = sbr.rel (%p434) target = $region84
        $region83: #{tpu_custom_call.1} parent=63 // pred_region
          %437 = dma.done [#allocation9], 1024
        $region84: #{tpu_custom_call.1} parent=63 // pred_fallthru
          _
        // Predicated region
        $region85: #{tpu_custom_call.1} parent=63 // pred_check
          %p438 = pneg %p241
        $region86: #{tpu_custom_call.1} parent=63 // pred_check_branch
          %440 = sbr.rel (%p438) target = $region88
        $region87: #{tpu_custom_call.1} parent=63 // pred_region
          %441 = dma.done [#allocation12], 1024
        $region88: #{tpu_custom_call.1} parent=63 // pred_fallthru
          _
        %s442 = sand.u32 %s39, 1
        %s443 = scalar_lea.sflag [#allocation3], %s442
        %s444 = sand.u32 %s39, 1
        %s445 = smul.addr %s444, 8
        %s446 = scalar_lea.vmem [#allocation2], %s445
        %p447 = pneg %p52
        %p448 = pneg %p49
        %p449 = pneg %p73
        %p450 = pneg %p70
        %p451 = pneg %p94
        %p452 = pneg %p91
        %p453 = pneg %p115
        %p454 = pneg %p112
        %p455 = pneg %p136
        %p456 = pneg %p133
        %p457 = pneg %p157
        %p458 = pneg %p154
        %p459 = pneg %p178
        %p460 = pneg %p175
        %p461 = pneg %p199
        %p462 = pneg %p196
        %p463 = pneg %p220
        %p464 = pneg %p217
        %p465 = pneg %p241
        %p466 = pneg %p238
        %p467 = pneg %p262
        %p468 = pneg %p259
        %p469 = pneg %p288
        %p470 = pneg %p285
        %s471 = sand.u32 %s275, 1
        %s472 = scalar_lea.sflag [#allocation4], %s471
        %s473 = sand.u32 %s275, 1
        %s474 = smul.addr %s473, 8
        %s475 = scalar_lea.vmem [#allocation13], %s474
        %v477 = vld [vmem:[%s417] sm:$0xff]
        %v478 = vld [vmem:[#allocation5] sm:$0xff]
        %v479 = vld [vmem:[#allocation5 + $0x8] sm:$0xff]
        %v480 = vld [vmem:[#allocation5 + $0x10] sm:$0xff]
        %v481 = vld [vmem:[#allocation5 + $0x18] sm:$0xff]
        %v482 = vld [vmem:[#allocation5 + $0x20] sm:$0xff]
        %v483 = vld [vmem:[#allocation5 + $0x28] sm:$0xff]
        %v484 = vld [vmem:[#allocation5 + $0x30] sm:$0xff]
        %v485 = vld [vmem:[#allocation5 + $0x38] sm:$0xff]
        %v486 = vld [vmem:[#allocation5 + $0x40] sm:$0xff]
        %v487 = vld [vmem:[#allocation5 + $0x48] sm:$0xff]
        %v488 = vld [vmem:[#allocation5 + $0x50] sm:$0xff]
        %v489 = vld [vmem:[#allocation5 + $0x58] sm:$0xff]
        %v490 = vld [vmem:[#allocation5 + $0x60] sm:$0xff]
        %v491 = vld [vmem:[#allocation5 + $0x68] sm:$0xff]
        %v492 = vld [vmem:[#allocation5 + $0x70] sm:$0xff]
        %v493 = vld [vmem:[#allocation5 + $0x78] sm:$0xff]
        %v494 = vld [vmem:[#allocation5 + $0x80] sm:$0xff]
        %v495 = vld [vmem:[#allocation5 + $0x88] sm:$0xff]
        %v496 = vld [vmem:[#allocation5 + $0x90] sm:$0xff]
        %v497 = vld [vmem:[#allocation5 + $0x98] sm:$0xff]
        %v498 = vld [vmem:[#allocation5 + $0xa0] sm:$0xff]
        %v499 = vld [vmem:[#allocation5 + $0xa8] sm:$0xff]
        %v500 = vld [vmem:[#allocation5 + $0xb0] sm:$0xff]
        %v501 = vld [vmem:[#allocation5 + $0xb8] sm:$0xff]
        %v502 = vld [vmem:[#allocation5 + $0xc0] sm:$0xff]
        %v503 = vld [vmem:[#allocation5 + $0xc8] sm:$0xff]
        %v504 = vld [vmem:[#allocation5 + $0xd0] sm:$0xff]
        %v505 = vld [vmem:[#allocation5 + $0xd8] sm:$0xff]
        %v506 = vld [vmem:[#allocation5 + $0xe0] sm:$0xff]
        %v507 = vld [vmem:[#allocation5 + $0xe8] sm:$0xff]
        %v508 = vld [vmem:[#allocation5 + $0xf0] sm:$0xff]
        %v509 = vld [vmem:[#allocation5 + $0xf8] sm:$0xff]
        %v510 = vld [vmem:[#allocation5 + $0x100] sm:$0xff]
        %v511 = vld [vmem:[#allocation5 + $0x108] sm:$0xff]
        %v512 = vld [vmem:[#allocation5 + $0x110] sm:$0xff]
        %v513 = vld [vmem:[#allocation5 + $0x118] sm:$0xff]
        %v514 = vld [vmem:[#allocation5 + $0x120] sm:$0xff]
        %v515 = vld [vmem:[#allocation5 + $0x128] sm:$0xff]
        %v516 = vld [vmem:[#allocation5 + $0x130] sm:$0xff]
        %v517 = vld [vmem:[#allocation5 + $0x138] sm:$0xff]
        %v518 = vld [vmem:[#allocation5 + $0x140] sm:$0xff]
        %v519 = vld [vmem:[#allocation5 + $0x148] sm:$0xff]
        %v520 = vld [vmem:[#allocation5 + $0x150] sm:$0xff]
        %v521 = vld [vmem:[#allocation5 + $0x158] sm:$0xff]
        %v522 = vld [vmem:[#allocation5 + $0x160] sm:$0xff]
        %v523 = vld [vmem:[#allocation5 + $0x168] sm:$0xff]
        %v524 = vld [vmem:[#allocation5 + $0x170] sm:$0xff]
        %v525 = vld [vmem:[#allocation5 + $0x178] sm:$0xff]
        %v526 = vld [vmem:[#allocation5 + $0x180] sm:$0xff]
        %v527 = vld [vmem:[#allocation5 + $0x188] sm:$0xff]
        %v528 = vld [vmem:[#allocation5 + $0x190] sm:$0xff]
        %v529 = vld [vmem:[#allocation5 + $0x198] sm:$0xff]
        %v530 = vld [vmem:[#allocation5 + $0x1a0] sm:$0xff]
        %v531 = vld [vmem:[#allocation5 + $0x1a8] sm:$0xff]
        %v532 = vld [vmem:[#allocation5 + $0x1b0] sm:$0xff]
        %v533 = vld [vmem:[#allocation5 + $0x1b8] sm:$0xff]
        %v534 = vld [vmem:[#allocation5 + $0x1c0] sm:$0xff]
        %v535 = vld [vmem:[#allocation5 + $0x1c8] sm:$0xff]
        %v536 = vld [vmem:[#allocation5 + $0x1d0] sm:$0xff]
        %v537 = vld [vmem:[#allocation5 + $0x1d8] sm:$0xff]
        %v538 = vld [vmem:[#allocation5 + $0x1e0] sm:$0xff]
        %v539 = vld [vmem:[#allocation5 + $0x1e8] sm:$0xff]
        %v540 = vld [vmem:[#allocation5 + $0x1f0] sm:$0xff]
        %v541 = vld [vmem:[#allocation5 + $0x1f8] sm:$0xff]
        %v542 = vld [vmem:[%s2] sm:$0xf]
        %v544 = vlaneseq
        %v545 = vshrl.u32 %v544, 7
        %v546 = vsub.s32 0, %v545
        %v547 = vrot.slane %v542, %v546
        %v548 = vlaneseq
        %v549 = vshrl.u32 %v548, 7
        %v550 = vsub.s32 1, %v549
        %v551 = vrot.slane %v542, %v550
        %v552 = vlaneseq
        %v553 = vshrl.u32 %v552, 7
        %v554 = vsub.s32 2, %v553
        %v555 = vrot.slane %v542, %v554
        %v556 = vlaneseq
        %v557 = vshrl.u32 %v556, 7
        %v558 = vsub.s32 3, %v557
        %v559 = vrot.slane %v542, %v558
        %v565 = vunpack.c.l.b16 %v477
        %v566 = vunpack.c.h.b16 %v477
        %v567 = vpack.c.b16 %v565, %v565
        %v568 = vpack.c.b16 %v566, %v566
        %v635 = vunpack.c.l.b16 %v478
        %v636 = vunpack.c.h.b16 %v478
        %v637 = vunpack.c.l.b16 %v479
        %v638 = vunpack.c.h.b16 %v479
        %v639 = vunpack.c.l.b16 %v480
        %v640 = vunpack.c.h.b16 %v480
        %v641 = vunpack.c.l.b16 %v481
        %v642 = vunpack.c.h.b16 %v481
        %v643 = vunpack.c.l.b16 %v482
        %v644 = vunpack.c.h.b16 %v482
        %v645 = vunpack.c.l.b16 %v483
        %v646 = vunpack.c.h.b16 %v483
        %v647 = vunpack.c.l.b16 %v484
        %v648 = vunpack.c.h.b16 %v484
        %v649 = vunpack.c.l.b16 %v485
        %v650 = vunpack.c.h.b16 %v485
        %v651 = vunpack.c.l.b16 %v486
        %v652 = vunpack.c.h.b16 %v486
        %v653 = vunpack.c.l.b16 %v487
        %v654 = vunpack.c.h.b16 %v487
        %v655 = vunpack.c.l.b16 %v488
        %v656 = vunpack.c.h.b16 %v488
        %v657 = vunpack.c.l.b16 %v489
        %v658 = vunpack.c.h.b16 %v489
        %v659 = vunpack.c.l.b16 %v490
        %v660 = vunpack.c.h.b16 %v490
        %v661 = vunpack.c.l.b16 %v491
        %v662 = vunpack.c.h.b16 %v491
        %v663 = vunpack.c.l.b16 %v492
        %v664 = vunpack.c.h.b16 %v492
        %v665 = vunpack.c.l.b16 %v493
        %v666 = vunpack.c.h.b16 %v493
        %v667 = vunpack.c.l.b16 %v494
        %v668 = vunpack.c.h.b16 %v494
        %v669 = vunpack.c.l.b16 %v495
        %v670 = vunpack.c.h.b16 %v495
        %v671 = vunpack.c.l.b16 %v496
        %v672 = vunpack.c.h.b16 %v496
        %v673 = vunpack.c.l.b16 %v497
        %v674 = vunpack.c.h.b16 %v497
        %v675 = vunpack.c.l.b16 %v498
        %v676 = vunpack.c.h.b16 %v498
        %v677 = vunpack.c.l.b16 %v499
        %v678 = vunpack.c.h.b16 %v499
        %v679 = vunpack.c.l.b16 %v500
        %v680 = vunpack.c.h.b16 %v500
        %v681 = vunpack.c.l.b16 %v501
        %v682 = vunpack.c.h.b16 %v501
        %v683 = vunpack.c.l.b16 %v502
        %v684 = vunpack.c.h.b16 %v502
        %v685 = vunpack.c.l.b16 %v503
        %v686 = vunpack.c.h.b16 %v503
        %v687 = vunpack.c.l.b16 %v504
        %v688 = vunpack.c.h.b16 %v504
        %v689 = vunpack.c.l.b16 %v505
        %v690 = vunpack.c.h.b16 %v505
        %v691 = vunpack.c.l.b16 %v506
        %v692 = vunpack.c.h.b16 %v506
        %v693 = vunpack.c.l.b16 %v507
        %v694 = vunpack.c.h.b16 %v507
        %v695 = vunpack.c.l.b16 %v508
        %v696 = vunpack.c.h.b16 %v508
        %v697 = vunpack.c.l.b16 %v509
        %v698 = vunpack.c.h.b16 %v509
        %v699 = vunpack.c.l.b16 %v510
        %v700 = vunpack.c.h.b16 %v510
        %v701 = vunpack.c.l.b16 %v511
        %v702 = vunpack.c.h.b16 %v511
        %v703 = vunpack.c.l.b16 %v512
        %v704 = vunpack.c.h.b16 %v512
        %v705 = vunpack.c.l.b16 %v513
        %v706 = vunpack.c.h.b16 %v513
        %v707 = vunpack.c.l.b16 %v514
        %v708 = vunpack.c.h.b16 %v514
        %v709 = vunpack.c.l.b16 %v515
        %v710 = vunpack.c.h.b16 %v515
        %v711 = vunpack.c.l.b16 %v516
        %v712 = vunpack.c.h.b16 %v516
        %v713 = vunpack.c.l.b16 %v517
        %v714 = vunpack.c.h.b16 %v517
        %v715 = vunpack.c.l.b16 %v518
        %v716 = vunpack.c.h.b16 %v518
        %v717 = vunpack.c.l.b16 %v519
        %v718 = vunpack.c.h.b16 %v519
        %v719 = vunpack.c.l.b16 %v520
        %v720 = vunpack.c.h.b16 %v520
        %v721 = vunpack.c.l.b16 %v521
        %v722 = vunpack.c.h.b16 %v521
        %v723 = vunpack.c.l.b16 %v522
        %v724 = vunpack.c.h.b16 %v522
        %v725 = vunpack.c.l.b16 %v523
        %v726 = vunpack.c.h.b16 %v523
        %v727 = vunpack.c.l.b16 %v524
        %v728 = vunpack.c.h.b16 %v524
        %v729 = vunpack.c.l.b16 %v525
        %v730 = vunpack.c.h.b16 %v525
        %v731 = vunpack.c.l.b16 %v526
        %v732 = vunpack.c.h.b16 %v526
        %v733 = vunpack.c.l.b16 %v527
        %v734 = vunpack.c.h.b16 %v527
        %v735 = vunpack.c.l.b16 %v528
        %v736 = vunpack.c.h.b16 %v528
        %v737 = vunpack.c.l.b16 %v529
        %v738 = vunpack.c.h.b16 %v529
        %v739 = vunpack.c.l.b16 %v530
        %v740 = vunpack.c.h.b16 %v530
        %v741 = vunpack.c.l.b16 %v531
        %v742 = vunpack.c.h.b16 %v531
        %v743 = vunpack.c.l.b16 %v532
        %v744 = vunpack.c.h.b16 %v532
        %v745 = vunpack.c.l.b16 %v533
        %v746 = vunpack.c.h.b16 %v533
        %v747 = vunpack.c.l.b16 %v534
        %v748 = vunpack.c.h.b16 %v534
        %v749 = vunpack.c.l.b16 %v535
        %v750 = vunpack.c.h.b16 %v535
        %v751 = vunpack.c.l.b16 %v536
        %v752 = vunpack.c.h.b16 %v536
        %v753 = vunpack.c.l.b16 %v537
        %v754 = vunpack.c.h.b16 %v537
        %v755 = vunpack.c.l.b16 %v538
        %v756 = vunpack.c.h.b16 %v538
        %v757 = vunpack.c.l.b16 %v539
        %v758 = vunpack.c.h.b16 %v539
        %v759 = vunpack.c.l.b16 %v540
        %v760 = vunpack.c.h.b16 %v540
        %v761 = vunpack.c.l.b16 %v541
        %v762 = vunpack.c.h.b16 %v541
        %v763 = vpack.c.b16 %v639, %v635
        %v764 = vpack.c.b16 %v640, %v636
        %v765 = vpack.c.b16 %v641, %v637
        %v766 = vpack.c.b16 %v642, %v638
        %v767 = vpack.c.b16 %v647, %v643
        %v768 = vpack.c.b16 %v648, %v644
        %v769 = vpack.c.b16 %v649, %v645
        %v770 = vpack.c.b16 %v650, %v646
        %v771 = vpack.c.b16 %v655, %v651
        %v772 = vpack.c.b16 %v656, %v652
        %v773 = vpack.c.b16 %v657, %v653
        %v774 = vpack.c.b16 %v658, %v654
        %v775 = vpack.c.b16 %v663, %v659
        %v776 = vpack.c.b16 %v664, %v660
        %v777 = vpack.c.b16 %v665, %v661
        %v778 = vpack.c.b16 %v666, %v662
        %v779 = vpack.c.b16 %v671, %v667
        %v780 = vpack.c.b16 %v672, %v668
        %v781 = vpack.c.b16 %v673, %v669
        %v782 = vpack.c.b16 %v674, %v670
        %v783 = vpack.c.b16 %v679, %v675
        %v784 = vpack.c.b16 %v680, %v676
        %v785 = vpack.c.b16 %v681, %v677
        %v786 = vpack.c.b16 %v682, %v678
        %v787 = vpack.c.b16 %v687, %v683
        %v788 = vpack.c.b16 %v688, %v684
        %v789 = vpack.c.b16 %v689, %v685
        %v790 = vpack.c.b16 %v690, %v686
        %v791 = vpack.c.b16 %v695, %v691
        %v792 = vpack.c.b16 %v696, %v692
        %v793 = vpack.c.b16 %v697, %v693
        %v794 = vpack.c.b16 %v698, %v694
        %v795 = vpack.c.b16 %v703, %v699
        %v796 = vpack.c.b16 %v704, %v700
        %v797 = vpack.c.b16 %v705, %v701
        %v798 = vpack.c.b16 %v706, %v702
        %v799 = vpack.c.b16 %v711, %v707
        %v800 = vpack.c.b16 %v712, %v708
        %v801 = vpack.c.b16 %v713, %v709
        %v802 = vpack.c.b16 %v714, %v710
        %v803 = vpack.c.b16 %v719, %v715
        %v804 = vpack.c.b16 %v720, %v716
        %v805 = vpack.c.b16 %v721, %v717
        %v806 = vpack.c.b16 %v722, %v718
        %v807 = vpack.c.b16 %v727, %v723
        %v808 = vpack.c.b16 %v728, %v724
        %v809 = vpack.c.b16 %v729, %v725
        %v810 = vpack.c.b16 %v730, %v726
        %v811 = vpack.c.b16 %v735, %v731
        %v812 = vpack.c.b16 %v736, %v732
        %v813 = vpack.c.b16 %v737, %v733
        %v814 = vpack.c.b16 %v738, %v734
        %v815 = vpack.c.b16 %v743, %v739
        %v816 = vpack.c.b16 %v744, %v740
        %v817 = vpack.c.b16 %v745, %v741
        %v818 = vpack.c.b16 %v746, %v742
        %v819 = vpack.c.b16 %v751, %v747
        %v820 = vpack.c.b16 %v752, %v748
        %v821 = vpack.c.b16 %v753, %v749
        %v822 = vpack.c.b16 %v754, %v750
        %v823 = vpack.c.b16 %v759, %v755
        %v824 = vpack.c.b16 %v760, %v756
        %v825 = vpack.c.b16 %v761, %v757
        %v826 = vpack.c.b16 %v762, %v758
        %891 = vmatprep.subr.bf16.mxu0 %v764
        %892 = vmatpush1.bf16.msra.mxu0 %v763
        %893 = vmatprep.subr.bf16.mxu0 %v768
        %894 = vmatpush1.bf16.msra.mxu0 %v767
        %895 = vmatprep.subr.bf16.mxu0 %v772
        %896 = vmatpush1.bf16.msra.mxu0 %v771
        %897 = vmatprep.subr.bf16.mxu0 %v776
        %898 = vmatpush1.bf16.msra.mxu0 %v775
        %899 = vmatprep.subr.bf16.mxu0 %v780
        %900 = vmatpush1.bf16.msra.mxu0 %v779
        %901 = vmatprep.subr.bf16.mxu0 %v784
        %902 = vmatpush1.bf16.msra.mxu0 %v783
        %903 = vmatprep.subr.bf16.mxu0 %v788
        %904 = vmatpush1.bf16.msra.mxu0 %v787
        %905 = vmatprep.subr.bf16.mxu0 %v792
        %906 = vmatpush1.bf16.msra.mxu0 %v791
        %907 = vmatprep.subr.bf16.mxu0 %v796
        %908 = vmatpush1.bf16.msra.mxu0 %v795
        %909 = vmatprep.subr.bf16.mxu0 %v800
        %910 = vmatpush1.bf16.msra.mxu0 %v799
        %911 = vmatprep.subr.bf16.mxu0 %v804
        %912 = vmatpush1.bf16.msra.mxu0 %v803
        %913 = vmatprep.subr.bf16.mxu0 %v808
        %914 = vmatpush1.bf16.msra.mxu0 %v807
        %915 = vmatprep.subr.bf16.mxu0 %v812
        %916 = vmatpush1.bf16.msra.mxu0 %v811
        %917 = vmatprep.subr.bf16.mxu0 %v816
        %918 = vmatpush1.bf16.msra.mxu0 %v815
        %919 = vmatprep.subr.bf16.mxu0 %v820
        %920 = vmatpush1.bf16.msra.mxu0 %v819
        %921 = vmatprep.subr.bf16.mxu0 %v824
        %922 = vmatpush1.bf16.msra.mxu0 %v823
        %923 = vmatprep.mubr.bf16.mxu0 %v568
        %924 = vmatmul.mubr.bf16.gmra.mrb[0].mxu0 %v567
        %v925 = vpop.f32.mrb[0].mxu0
        %v926 = vadd.f32 %v547, %v925
        %v927 = vpop.f32.mrb[0].mxu0
        %v928 = vadd.f32 %v551, %v927
        %v929 = vpop.f32.mrb[0].mxu0
        %v930 = vpop.f32.mrb[0].mxu0
        %931 = vdwg.mxu0
        %932 = vmatprep.subr.bf16.mxu0 %v766
        %933 = vmatpush1.bf16.msra.mxu0 %v765
        %934 = vmatprep.subr.bf16.mxu0 %v770
        %935 = vmatpush1.bf16.msra.mxu0 %v769
        %936 = vmatprep.subr.bf16.mxu0 %v774
        %937 = vmatpush1.bf16.msra.mxu0 %v773
        %938 = vmatprep.subr.bf16.mxu0 %v778
        %939 = vmatpush1.bf16.msra.mxu0 %v777
        %940 = vmatprep.subr.bf16.mxu0 %v782
        %941 = vmatpush1.bf16.msra.mxu0 %v781
        %942 = vmatprep.subr.bf16.mxu0 %v786
        %943 = vmatpush1.bf16.msra.mxu0 %v785
        %944 = vmatprep.subr.bf16.mxu0 %v790
        %945 = vmatpush1.bf16.msra.mxu0 %v789
        %946 = vmatprep.subr.bf16.mxu0 %v794
        %947 = vmatpush1.bf16.msra.mxu0 %v793
        %948 = vmatprep.subr.bf16.mxu0 %v798
        %949 = vmatpush1.bf16.msra.mxu0 %v797
        %950 = vmatprep.subr.bf16.mxu0 %v802
        %951 = vmatpush1.bf16.msra.mxu0 %v801
        %952 = vmatprep.subr.bf16.mxu0 %v806
        %953 = vmatpush1.bf16.msra.mxu0 %v805
        %954 = vmatprep.subr.bf16.mxu0 %v810
        %955 = vmatpush1.bf16.msra.mxu0 %v809
        %956 = vmatprep.subr.bf16.mxu0 %v814
        %957 = vmatpush1.bf16.msra.mxu0 %v813
        %958 = vmatprep.subr.bf16.mxu0 %v818
        %959 = vmatpush1.bf16.msra.mxu0 %v817
        %960 = vmatprep.subr.bf16.mxu0 %v822
        %961 = vmatpush1.bf16.msra.mxu0 %v821
        %962 = vmatprep.subr.bf16.mxu0 %v826
        %963 = vmatpush1.bf16.msra.mxu0 %v825
        %964 = vmatprep.mubr.bf16.mxu0 %v568
        %965 = vmatmul.mubr.bf16.gmra.mrb[0].mxu0 %v567
        %v966 = vpop.f32.mrb[0].mxu0
        %v967 = vadd.f32 %v555, %v966
        %v968 = vpop.f32.mrb[0].mxu0
        %v969 = vadd.f32 %v559, %v968
        %v970 = vpop.f32.mrb[0].mxu0
        %v971 = vpop.f32.mrb[0].mxu0
        %972 = vdwg.mxu0
        %v973 = vmax.f32 %v926, 0.0
        %v974 = vmax.f32 %v928, 0.0
        %v975 = vmax.f32 %v967, 0.0
        %v976 = vmax.f32 %v969, 0.0
        %v977 = vpack.c.bf16 %v973, %v973
        %v978 = vpack.c.bf16 %v974, %v974
        %v979 = vpack.c.bf16 %v975, %v975
        %v980 = vpack.c.bf16 %v976, %v976
        %v981 = vld [vmem:[#allocation7] sm:$0xff]
        %v982 = vld [vmem:[#allocation7 + $0x8] sm:$0xff]
        %v983 = vld [vmem:[#allocation7 + $0x10] sm:$0xff]
        %v984 = vld [vmem:[#allocation7 + $0x18] sm:$0xff]
        %v985 = vld [vmem:[#allocation7 + $0x20] sm:$0xff]
        %v986 = vld [vmem:[#allocation7 + $0x28] sm:$0xff]
        %v987 = vld [vmem:[#allocation7 + $0x30] sm:$0xff]
        %v988 = vld [vmem:[#allocation7 + $0x38] sm:$0xff]
        %v989 = vld [vmem:[#allocation7 + $0x40] sm:$0xff]
        %v990 = vld [vmem:[#allocation7 + $0x48] sm:$0xff]
        %v991 = vld [vmem:[#allocation7 + $0x50] sm:$0xff]
        %v992 = vld [vmem:[#allocation7 + $0x58] sm:$0xff]
        %v993 = vld [vmem:[#allocation7 + $0x60] sm:$0xff]
        %v994 = vld [vmem:[#allocation7 + $0x68] sm:$0xff]
        %v995 = vld [vmem:[#allocation7 + $0x70] sm:$0xff]
        %v996 = vld [vmem:[#allocation7 + $0x78] sm:$0xff]
        %v997 = vld [vmem:[#allocation7 + $0x80] sm:$0xff]
        %v998 = vld [vmem:[#allocation7 + $0x88] sm:$0xff]
        %v999 = vld [vmem:[#allocation7 + $0x90] sm:$0xff]
        %v1000 = vld [vmem:[#allocation7 + $0x98] sm:$0xff]
        %v1001 = vld [vmem:[#allocation7 + $0xa0] sm:$0xff]
        %v1002 = vld [vmem:[#allocation7 + $0xa8] sm:$0xff]
        %v1003 = vld [vmem:[#allocation7 + $0xb0] sm:$0xff]
        %v1004 = vld [vmem:[#allocation7 + $0xb8] sm:$0xff]
        %v1005 = vld [vmem:[#allocation7 + $0xc0] sm:$0xff]
        %v1006 = vld [vmem:[#allocation7 + $0xc8] sm:$0xff]
        %v1007 = vld [vmem:[#allocation7 + $0xd0] sm:$0xff]
        %v1008 = vld [vmem:[#allocation7 + $0xd8] sm:$0xff]
        %v1009 = vld [vmem:[#allocation7 + $0xe0] sm:$0xff]
        %v1010 = vld [vmem:[#allocation7 + $0xe8] sm:$0xff]
        %v1011 = vld [vmem:[#allocation7 + $0xf0] sm:$0xff]
        %v1012 = vld [vmem:[#allocation7 + $0xf8] sm:$0xff]
        %v1013 = vld [vmem:[#allocation7 + $0x100] sm:$0xff]
        %v1014 = vld [vmem:[#allocation7 + $0x108] sm:$0xff]
        %v1015 = vld [vmem:[#allocation7 + $0x110] sm:$0xff]
        %v1016 = vld [vmem:[#allocation7 + $0x118] sm:$0xff]
        %v1017 = vld [vmem:[#allocation7 + $0x120] sm:$0xff]
        %v1018 = vld [vmem:[#allocation7 + $0x128] sm:$0xff]
        %v1019 = vld [vmem:[#allocation7 + $0x130] sm:$0xff]
        %v1020 = vld [vmem:[#allocation7 + $0x138] sm:$0xff]
        %v1021 = vld [vmem:[#allocation7 + $0x140] sm:$0xff]
        %v1022 = vld [vmem:[#allocation7 + $0x148] sm:$0xff]
        %v1023 = vld [vmem:[#allocation7 + $0x150] sm:$0xff]
        %v1024 = vld [vmem:[#allocation7 + $0x158] sm:$0xff]
        %v1025 = vld [vmem:[#allocation7 + $0x160] sm:$0xff]
        %v1026 = vld [vmem:[#allocation7 + $0x168] sm:$0xff]
        %v1027 = vld [vmem:[#allocation7 + $0x170] sm:$0xff]
        %v1028 = vld [vmem:[#allocation7 + $0x178] sm:$0xff]
        %v1029 = vld [vmem:[#allocation7 + $0x180] sm:$0xff]
        %v1030 = vld [vmem:[#allocation7 + $0x188] sm:$0xff]
        %v1031 = vld [vmem:[#allocation7 + $0x190] sm:$0xff]
        %v1032 = vld [vmem:[#allocation7 + $0x198] sm:$0xff]
        %v1033 = vld [vmem:[#allocation7 + $0x1a0] sm:$0xff]
        %v1034 = vld [vmem:[#allocation7 + $0x1a8] sm:$0xff]
        %v1035 = vld [vmem:[#allocation7 + $0x1b0] sm:$0xff]
        %v1036 = vld [vmem:[#allocation7 + $0x1b8] sm:$0xff]
        %v1037 = vld [vmem:[#allocation7 + $0x1c0] sm:$0xff]
        %v1038 = vld [vmem:[#allocation7 + $0x1c8] sm:$0xff]
        %v1039 = vld [vmem:[#allocation7 + $0x1d0] sm:$0xff]
        %v1040 = vld [vmem:[#allocation7 + $0x1d8] sm:$0xff]
        %v1041 = vld [vmem:[#allocation7 + $0x1e0] sm:$0xff]
        %v1042 = vld [vmem:[#allocation7 + $0x1e8] sm:$0xff]
        %v1043 = vld [vmem:[#allocation7 + $0x1f0] sm:$0xff]
        %v1044 = vld [vmem:[#allocation7 + $0x1f8] sm:$0xff]
        %v1045 = vld [vmem:[%s4] sm:$0x3]
        %v1047 = vlaneseq
        %v1048 = vshrl.u32 %v1047, 7
        %v1049 = vsub.s32 0, %v1048
        %v1050 = vrot.slane %v1045, %v1049
        %v1051 = vlaneseq
        %v1052 = vshrl.u32 %v1051, 7
        %v1053 = vsub.s32 1, %v1052
        %v1054 = vrot.slane %v1045, %v1053
        %v1121 = vunpack.c.l.b16 %v981
        %v1122 = vunpack.c.h.b16 %v981
        %v1123 = vunpack.c.l.b16 %v982
        %v1124 = vunpack.c.h.b16 %v982
        %v1125 = vunpack.c.l.b16 %v983
        %v1126 = vunpack.c.h.b16 %v983
        %v1127 = vunpack.c.l.b16 %v984
        %v1128 = vunpack.c.h.b16 %v984
        %v1129 = vunpack.c.l.b16 %v985
        %v1130 = vunpack.c.h.b16 %v985
        %v1131 = vunpack.c.l.b16 %v986
        %v1132 = vunpack.c.h.b16 %v986
        %v1133 = vunpack.c.l.b16 %v987
        %v1134 = vunpack.c.h.b16 %v987
        %v1135 = vunpack.c.l.b16 %v988
        %v1136 = vunpack.c.h.b16 %v988
        %v1137 = vunpack.c.l.b16 %v989
        %v1138 = vunpack.c.h.b16 %v989
        %v1139 = vunpack.c.l.b16 %v990
        %v1140 = vunpack.c.h.b16 %v990
        %v1141 = vunpack.c.l.b16 %v991
        %v1142 = vunpack.c.h.b16 %v991
        %v1143 = vunpack.c.l.b16 %v992
        %v1144 = vunpack.c.h.b16 %v992
        %v1145 = vunpack.c.l.b16 %v993
        %v1146 = vunpack.c.h.b16 %v993
        %v1147 = vunpack.c.l.b16 %v994
        %v1148 = vunpack.c.h.b16 %v994
        %v1149 = vunpack.c.l.b16 %v995
        %v1150 = vunpack.c.h.b16 %v995
        %v1151 = vunpack.c.l.b16 %v996
        %v1152 = vunpack.c.h.b16 %v996
        %v1153 = vunpack.c.l.b16 %v997
        %v1154 = vunpack.c.h.b16 %v997
        %v1155 = vunpack.c.l.b16 %v998
        %v1156 = vunpack.c.h.b16 %v998
        %v1157 = vunpack.c.l.b16 %v999
        %v1158 = vunpack.c.h.b16 %v999
        %v1159 = vunpack.c.l.b16 %v1000
        %v1160 = vunpack.c.h.b16 %v1000
        %v1161 = vunpack.c.l.b16 %v1001
        %v1162 = vunpack.c.h.b16 %v1001
        %v1163 = vunpack.c.l.b16 %v1002
        %v1164 = vunpack.c.h.b16 %v1002
        %v1165 = vunpack.c.l.b16 %v1003
        %v1166 = vunpack.c.h.b16 %v1003
        %v1167 = vunpack.c.l.b16 %v1004
        %v1168 = vunpack.c.h.b16 %v1004
        %v1169 = vunpack.c.l.b16 %v1005
        %v1170 = vunpack.c.h.b16 %v1005
        %v1171 = vunpack.c.l.b16 %v1006
        %v1172 = vunpack.c.h.b16 %v1006
        %v1173 = vunpack.c.l.b16 %v1007
        %v1174 = vunpack.c.h.b16 %v1007
        %v1175 = vunpack.c.l.b16 %v1008
        %v1176 = vunpack.c.h.b16 %v1008
        %v1177 = vunpack.c.l.b16 %v1009
        %v1178 = vunpack.c.h.b16 %v1009
        %v1179 = vunpack.c.l.b16 %v1010
        %v1180 = vunpack.c.h.b16 %v1010
        %v1181 = vunpack.c.l.b16 %v1011
        %v1182 = vunpack.c.h.b16 %v1011
        %v1183 = vunpack.c.l.b16 %v1012
        %v1184 = vunpack.c.h.b16 %v1012
        %v1185 = vunpack.c.l.b16 %v1013
        %v1186 = vunpack.c.h.b16 %v1013
        %v1187 = vunpack.c.l.b16 %v1014
        %v1188 = vunpack.c.h.b16 %v1014
        %v1189 = vunpack.c.l.b16 %v1015
        %v1190 = vunpack.c.h.b16 %v1015
        %v1191 = vunpack.c.l.b16 %v1016
        %v1192 = vunpack.c.h.b16 %v1016
        %v1193 = vunpack.c.l.b16 %v1017
        %v1194 = vunpack.c.h.b16 %v1017
        %v1195 = vunpack.c.l.b16 %v1018
        %v1196 = vunpack.c.h.b16 %v1018
        %v1197 = vunpack.c.l.b16 %v1019
        %v1198 = vunpack.c.h.b16 %v1019
        %v1199 = vunpack.c.l.b16 %v1020
        %v1200 = vunpack.c.h.b16 %v1020
        %v1201 = vunpack.c.l.b16 %v1021
        %v1202 = vunpack.c.h.b16 %v1021
        %v1203 = vunpack.c.l.b16 %v1022
        %v1204 = vunpack.c.h.b16 %v1022
        %v1205 = vunpack.c.l.b16 %v1023
        %v1206 = vunpack.c.h.b16 %v1023
        %v1207 = vunpack.c.l.b16 %v1024
        %v1208 = vunpack.c.h.b16 %v1024
        %v1209 = vunpack.c.l.b16 %v1025
        %v1210 = vunpack.c.h.b16 %v1025
        %v1211 = vunpack.c.l.b16 %v1026
        %v1212 = vunpack.c.h.b16 %v1026
        %v1213 = vunpack.c.l.b16 %v1027
        %v1214 = vunpack.c.h.b16 %v1027
        %v1215 = vunpack.c.l.b16 %v1028
        %v1216 = vunpack.c.h.b16 %v1028
        %v1217 = vunpack.c.l.b16 %v1029
        %v1218 = vunpack.c.h.b16 %v1029
        %v1219 = vunpack.c.l.b16 %v1030
        %v1220 = vunpack.c.h.b16 %v1030
        %v1221 = vunpack.c.l.b16 %v1031
        %v1222 = vunpack.c.h.b16 %v1031
        %v1223 = vunpack.c.l.b16 %v1032
        %v1224 = vunpack.c.h.b16 %v1032
        %v1225 = vunpack.c.l.b16 %v1033
        %v1226 = vunpack.c.h.b16 %v1033
        %v1227 = vunpack.c.l.b16 %v1034
        %v1228 = vunpack.c.h.b16 %v1034
        %v1229 = vunpack.c.l.b16 %v1035
        %v1230 = vunpack.c.h.b16 %v1035
        %v1231 = vunpack.c.l.b16 %v1036
        %v1232 = vunpack.c.h.b16 %v1036
        %v1233 = vunpack.c.l.b16 %v1037
        %v1234 = vunpack.c.h.b16 %v1037
        %v1235 = vunpack.c.l.b16 %v1038
        %v1236 = vunpack.c.h.b16 %v1038
        %v1237 = vunpack.c.l.b16 %v1039
        %v1238 = vunpack.c.h.b16 %v1039
        %v1239 = vunpack.c.l.b16 %v1040
        %v1240 = vunpack.c.h.b16 %v1040
        %v1241 = vunpack.c.l.b16 %v1041
        %v1242 = vunpack.c.h.b16 %v1041
        %v1243 = vunpack.c.l.b16 %v1042
        %v1244 = vunpack.c.h.b16 %v1042
        %v1245 = vunpack.c.l.b16 %v1043
        %v1246 = vunpack.c.h.b16 %v1043
        %v1247 = vunpack.c.l.b16 %v1044
        %v1248 = vunpack.c.h.b16 %v1044
        %v1249 = vpack.c.b16 %v1123, %v1121
        %v1250 = vpack.c.b16 %v1124, %v1122
        %v1251 = vpack.c.b16 %v1127, %v1125
        %v1252 = vpack.c.b16 %v1128, %v1126
        %v1253 = vpack.c.b16 %v1131, %v1129
        %v1254 = vpack.c.b16 %v1132, %v1130
        %v1255 = vpack.c.b16 %v1135, %v1133
        %v1256 = vpack.c.b16 %v1136, %v1134
        %v1257 = vpack.c.b16 %v1139, %v1137
        %v1258 = vpack.c.b16 %v1140, %v1138
        %v1259 = vpack.c.b16 %v1143, %v1141
        %v1260 = vpack.c.b16 %v1144, %v1142
        %v1261 = vpack.c.b16 %v1147, %v1145
        %v1262 = vpack.c.b16 %v1148, %v1146
        %v1263 = vpack.c.b16 %v1151, %v1149
        %v1264 = vpack.c.b16 %v1152, %v1150
        %v1265 = vpack.c.b16 %v1155, %v1153
        %v1266 = vpack.c.b16 %v1156, %v1154
        %v1267 = vpack.c.b16 %v1159, %v1157
        %v1268 = vpack.c.b16 %v1160, %v1158
        %v1269 = vpack.c.b16 %v1163, %v1161
        %v1270 = vpack.c.b16 %v1164, %v1162
        %v1271 = vpack.c.b16 %v1167, %v1165
        %v1272 = vpack.c.b16 %v1168, %v1166
        %v1273 = vpack.c.b16 %v1171, %v1169
        %v1274 = vpack.c.b16 %v1172, %v1170
        %v1275 = vpack.c.b16 %v1175, %v1173
        %v1276 = vpack.c.b16 %v1176, %v1174
        %v1277 = vpack.c.b16 %v1179, %v1177
        %v1278 = vpack.c.b16 %v1180, %v1178
        %v1279 = vpack.c.b16 %v1183, %v1181
        %v1280 = vpack.c.b16 %v1184, %v1182
        %v1281 = vpack.c.b16 %v1187, %v1185
        %v1282 = vpack.c.b16 %v1188, %v1186
        %v1283 = vpack.c.b16 %v1191, %v1189
        %v1284 = vpack.c.b16 %v1192, %v1190
        %v1285 = vpack.c.b16 %v1195, %v1193
        %v1286 = vpack.c.b16 %v1196, %v1194
        %v1287 = vpack.c.b16 %v1199, %v1197
        %v1288 = vpack.c.b16 %v1200, %v1198
        %v1289 = vpack.c.b16 %v1203, %v1201
        %v1290 = vpack.c.b16 %v1204, %v1202
        %v1291 = vpack.c.b16 %v1207, %v1205
        %v1292 = vpack.c.b16 %v1208, %v1206
        %v1293 = vpack.c.b16 %v1211, %v1209
        %v1294 = vpack.c.b16 %v1212, %v1210
        %v1295 = vpack.c.b16 %v1215, %v1213
        %v1296 = vpack.c.b16 %v1216, %v1214
        %v1297 = vpack.c.b16 %v1219, %v1217
        %v1298 = vpack.c.b16 %v1220, %v1218
        %v1299 = vpack.c.b16 %v1223, %v1221
        %v1300 = vpack.c.b16 %v1224, %v1222
        %v1301 = vpack.c.b16 %v1227, %v1225
        %v1302 = vpack.c.b16 %v1228, %v1226
        %v1303 = vpack.c.b16 %v1231, %v1229
        %v1304 = vpack.c.b16 %v1232, %v1230
        %v1305 = vpack.c.b16 %v1235, %v1233
        %v1306 = vpack.c.b16 %v1236, %v1234
        %v1307 = vpack.c.b16 %v1239, %v1237
        %v1308 = vpack.c.b16 %v1240, %v1238
        %v1309 = vpack.c.b16 %v1243, %v1241
        %v1310 = vpack.c.b16 %v1244, %v1242
        %v1311 = vpack.c.b16 %v1247, %v1245
        %v1312 = vpack.c.b16 %v1248, %v1246
        %1377 = vmatprep.subr.bf16.mxu0 %v1250
        %1378 = vmatpush1.bf16.msra.mxu0 %v1249
        %1379 = vmatprep.subr.bf16.mxu0 %v1252
        %1380 = vmatpush1.bf16.msra.mxu0 %v1251
        %1381 = vmatprep.subr.bf16.mxu0 %v1254
        %1382 = vmatpush1.bf16.msra.mxu0 %v1253
        %1383 = vmatprep.subr.bf16.mxu0 %v1256
        %1384 = vmatpush1.bf16.msra.mxu0 %v1255
        %1385 = vmatprep.subr.bf16.mxu0 %v1258
        %1386 = vmatpush1.bf16.msra.mxu0 %v1257
        %1387 = vmatprep.subr.bf16.mxu0 %v1260
        %1388 = vmatpush1.bf16.msra.mxu0 %v1259
        %1389 = vmatprep.subr.bf16.mxu0 %v1262
        %1390 = vmatpush1.bf16.msra.mxu0 %v1261
        %1391 = vmatprep.subr.bf16.mxu0 %v1264
        %1392 = vmatpush1.bf16.msra.mxu0 %v1263
        %1393 = vmatprep.subr.bf16.mxu0 %v1266
        %1394 = vmatpush1.bf16.msra.mxu0 %v1265
        %1395 = vmatprep.subr.bf16.mxu0 %v1268
        %1396 = vmatpush1.bf16.msra.mxu0 %v1267
        %1397 = vmatprep.subr.bf16.mxu0 %v1270
        %1398 = vmatpush1.bf16.msra.mxu0 %v1269
        %1399 = vmatprep.subr.bf16.mxu0 %v1272
        %1400 = vmatpush1.bf16.msra.mxu0 %v1271
        %1401 = vmatprep.subr.bf16.mxu0 %v1274
        %1402 = vmatpush1.bf16.msra.mxu0 %v1273
        %1403 = vmatprep.subr.bf16.mxu0 %v1276
        %1404 = vmatpush1.bf16.msra.mxu0 %v1275
        %1405 = vmatprep.subr.bf16.mxu0 %v1278
        %1406 = vmatpush1.bf16.msra.mxu0 %v1277
        %1407 = vmatprep.subr.bf16.mxu0 %v1280
        %1408 = vmatpush1.bf16.msra.mxu0 %v1279
        %1409 = vmatprep.mubr.bf16.mxu0 %v978
        %1410 = vmatmul.mubr.bf16.gmra.mrb[0].mxu0 %v977
        %v1411 = vpop.f32.mrb[0].mxu0
        %v1412 = vadd.f32 %v1050, %v1411
        %v1413 = vpop.f32.mrb[0].mxu0
        %v1414 = vadd.f32 %v1054, %v1413
        %v1415 = vpop.f32.mrb[0].mxu0
        %v1416 = vpop.f32.mrb[0].mxu0
        %1417 = vdwg.mxu0
        %1418 = vmatprep.subr.bf16.mxu0 %v1282
        %1419 = vmatpush1.bf16.msra.mxu0 %v1281
        %1420 = vmatprep.subr.bf16.mxu0 %v1284
        %1421 = vmatpush1.bf16.msra.mxu0 %v1283
        %1422 = vmatprep.subr.bf16.mxu0 %v1286
        %1423 = vmatpush1.bf16.msra.mxu0 %v1285
        %1424 = vmatprep.subr.bf16.mxu0 %v1288
        %1425 = vmatpush1.bf16.msra.mxu0 %v1287
        %1426 = vmatprep.subr.bf16.mxu0 %v1290
        %1427 = vmatpush1.bf16.msra.mxu0 %v1289
        %1428 = vmatprep.subr.bf16.mxu0 %v1292
        %1429 = vmatpush1.bf16.msra.mxu0 %v1291
        %1430 = vmatprep.subr.bf16.mxu0 %v1294
        %1431 = vmatpush1.bf16.msra.mxu0 %v1293
        %1432 = vmatprep.subr.bf16.mxu0 %v1296
        %1433 = vmatpush1.bf16.msra.mxu0 %v1295
        %1434 = vmatprep.subr.bf16.mxu0 %v1298
        %1435 = vmatpush1.bf16.msra.mxu0 %v1297
        %1436 = vmatprep.subr.bf16.mxu0 %v1300
        %1437 = vmatpush1.bf16.msra.mxu0 %v1299
        %1438 = vmatprep.subr.bf16.mxu0 %v1302
        %1439 = vmatpush1.bf16.msra.mxu0 %v1301
        %1440 = vmatprep.subr.bf16.mxu0 %v1304
        %1441 = vmatpush1.bf16.msra.mxu0 %v1303
        %1442 = vmatprep.subr.bf16.mxu0 %v1306
        %1443 = vmatpush1.bf16.msra.mxu0 %v1305
        %1444 = vmatprep.subr.bf16.mxu0 %v1308
        %1445 = vmatpush1.bf16.msra.mxu0 %v1307
        %1446 = vmatprep.subr.bf16.mxu0 %v1310
        %1447 = vmatpush1.bf16.msra.mxu0 %v1309
        %1448 = vmatprep.subr.bf16.mxu0 %v1312
        %1449 = vmatpush1.bf16.msra.mxu0 %v1311
        %1450 = vmatprep.mubr.bf16.mxu0 %v980
        %1451 = vmatmul.mubr.bf16.gmra.mrb[0].mxu0 %v979
        %v1452 = vpop.f32.mrb[0].mxu0
        %v1453 = vadd.f32 %v1412, %v1452
        %v1454 = vpop.f32.mrb[0].mxu0
        %v1455 = vadd.f32 %v1414, %v1454
        %v1456 = vpop.f32.mrb[0].mxu0
        %v1457 = vpop.f32.mrb[0].mxu0
        %1458 = vdwg.mxu0
        %v1459 = vmax.f32 %v1453, 0.0
        %v1460 = vmax.f32 %v1455, 0.0
        %v1461 = vpack.c.bf16 %v1459, %v1459
        %v1462 = vpack.c.bf16 %v1460, %v1460
        %v1463 = vld [vmem:[#allocation8] sm:$0xf]
        %v1464 = vld [vmem:[#allocation8 + $0x4] sm:$0xf]
        %v1465 = vld [vmem:[#allocation8 + $0x8] sm:$0xf]
        %v1466 = vld [vmem:[#allocation8 + $0xc] sm:$0xf]
        %v1467 = vld [vmem:[#allocation8 + $0x10] sm:$0xf]
        %v1468 = vld [vmem:[#allocation8 + $0x14] sm:$0xf]
        %v1469 = vld [vmem:[#allocation8 + $0x18] sm:$0xf]
        %v1470 = vld [vmem:[#allocation8 + $0x1c] sm:$0xf]
        %v1471 = vld [vmem:[#allocation8 + $0x20] sm:$0xf]
        %v1472 = vld [vmem:[#allocation8 + $0x24] sm:$0xf]
        %v1473 = vld [vmem:[#allocation8 + $0x28] sm:$0xf]
        %v1474 = vld [vmem:[#allocation8 + $0x2c] sm:$0xf]
        %v1475 = vld [vmem:[#allocation8 + $0x30] sm:$0xf]
        %v1476 = vld [vmem:[#allocation8 + $0x34] sm:$0xf]
        %v1477 = vld [vmem:[#allocation8 + $0x38] sm:$0xf]
        %v1478 = vld [vmem:[#allocation8 + $0x3c] sm:$0xf]
        %v1479 = vld [vmem:[#allocation8 + $0x40] sm:$0xf]
        %v1480 = vld [vmem:[#allocation8 + $0x44] sm:$0xf]
        %v1481 = vld [vmem:[#allocation8 + $0x48] sm:$0xf]
        %v1482 = vld [vmem:[#allocation8 + $0x4c] sm:$0xf]
        %v1483 = vld [vmem:[#allocation8 + $0x50] sm:$0xf]
        %v1484 = vld [vmem:[#allocation8 + $0x54] sm:$0xf]
        %v1485 = vld [vmem:[#allocation8 + $0x58] sm:$0xf]
        %v1486 = vld [vmem:[#allocation8 + $0x5c] sm:$0xf]
        %v1487 = vld [vmem:[#allocation8 + $0x60] sm:$0xf]
        %v1488 = vld [vmem:[#allocation8 + $0x64] sm:$0xf]
        %v1489 = vld [vmem:[#allocation8 + $0x68] sm:$0xf]
        %v1490 = vld [vmem:[#allocation8 + $0x6c] sm:$0xf]
        %v1491 = vld [vmem:[#allocation8 + $0x70] sm:$0xf]
        %v1492 = vld [vmem:[#allocation8 + $0x74] sm:$0xf]
        %v1493 = vld [vmem:[#allocation8 + $0x78] sm:$0xf]
        %v1494 = vld [vmem:[#allocation8 + $0x7c] sm:$0xf]
        %v1495 = vld [vmem:[%s6] sm:$0x1]
        %v1497 = vlaneseq
        %v1498 = vshrl.u32 %v1497, 7
        %v1499 = vsub.s32 0, %v1498
        %v1500 = vrot.slane %v1495, %v1499
        %v1534 = vunpack.c.l.b16 %v1463
        %v1535 = vunpack.c.l.b16 %v1464
        %v1536 = vunpack.c.l.b16 %v1465
        %v1537 = vunpack.c.l.b16 %v1466
        %v1538 = vunpack.c.l.b16 %v1467
        %v1539 = vunpack.c.l.b16 %v1468
        %v1540 = vunpack.c.l.b16 %v1469
        %v1541 = vunpack.c.l.b16 %v1470
        %v1542 = vunpack.c.l.b16 %v1471
        %v1543 = vunpack.c.l.b16 %v1472
        %v1544 = vunpack.c.l.b16 %v1473
        %v1545 = vunpack.c.l.b16 %v1474
        %v1546 = vunpack.c.l.b16 %v1475
        %v1547 = vunpack.c.l.b16 %v1476
        %v1548 = vunpack.c.l.b16 %v1477
        %v1549 = vunpack.c.l.b16 %v1478
        %v1550 = vunpack.c.l.b16 %v1479
        %v1551 = vunpack.c.l.b16 %v1480
        %v1552 = vunpack.c.l.b16 %v1481
        %v1553 = vunpack.c.l.b16 %v1482
        %v1554 = vunpack.c.l.b16 %v1483
        %v1555 = vunpack.c.l.b16 %v1484
        %v1556 = vunpack.c.l.b16 %v1485
        %v1557 = vunpack.c.l.b16 %v1486
        %v1558 = vunpack.c.l.b16 %v1487
        %v1559 = vunpack.c.l.b16 %v1488
        %v1560 = vunpack.c.l.b16 %v1489
        %v1561 = vunpack.c.l.b16 %v1490
        %v1562 = vunpack.c.l.b16 %v1491
        %v1563 = vunpack.c.l.b16 %v1492
        %v1564 = vunpack.c.l.b16 %v1493
        %v1565 = vunpack.c.l.b16 %v1494
        %v1566 = vpack.c.b16 %v1535, %v1534
        %v1567 = vpack.c.b16 %v1537, %v1536
        %v1568 = vpack.c.b16 %v1539, %v1538
        %v1569 = vpack.c.b16 %v1541, %v1540
        %v1570 = vpack.c.b16 %v1543, %v1542
        %v1571 = vpack.c.b16 %v1545, %v1544
        %v1572 = vpack.c.b16 %v1547, %v1546
        %v1573 = vpack.c.b16 %v1549, %v1548
        %v1574 = vpack.c.b16 %v1551, %v1550
        %v1575 = vpack.c.b16 %v1553, %v1552
        %v1576 = vpack.c.b16 %v1555, %v1554
        %v1577 = vpack.c.b16 %v1557, %v1556
        %v1578 = vpack.c.b16 %v1559, %v1558
        %v1579 = vpack.c.b16 %v1561, %v1560
        %v1580 = vpack.c.b16 %v1563, %v1562
        %v1581 = vpack.c.b16 %v1565, %v1564
        %1598 = vmatprep.subr.bf16.mxu0 0
        %1599 = vmatpush1.bf16.msra.mxu0 %v1566
        %1600 = vmatprep.subr.bf16.mxu0 0
        %1601 = vmatpush1.bf16.msra.mxu0 %v1567
        %1602 = vmatprep.subr.bf16.mxu0 0
        %1603 = vmatpush1.bf16.msra.mxu0 %v1568
        %1604 = vmatprep.subr.bf16.mxu0 0
        %1605 = vmatpush1.bf16.msra.mxu0 %v1569
        %1606 = vmatprep.subr.bf16.mxu0 0
        %1607 = vmatpush1.bf16.msra.mxu0 %v1570
        %1608 = vmatprep.subr.bf16.mxu0 0
        %1609 = vmatpush1.bf16.msra.mxu0 %v1571
        %1610 = vmatprep.subr.bf16.mxu0 0
        %1611 = vmatpush1.bf16.msra.mxu0 %v1572
        %1612 = vmatprep.subr.bf16.mxu0 0
        %1613 = vmatpush1.bf16.msra.mxu0 %v1573
        %1614 = vmatprep.subr.bf16.mxu0 0
        %1615 = vmatpush1.bf16.msra.mxu0 %v1574
        %1616 = vmatprep.subr.bf16.mxu0 0
        %1617 = vmatpush1.bf16.msra.mxu0 %v1575
        %1618 = vmatprep.subr.bf16.mxu0 0
        %1619 = vmatpush1.bf16.msra.mxu0 %v1576
        %1620 = vmatprep.subr.bf16.mxu0 0
        %1621 = vmatpush1.bf16.msra.mxu0 %v1577
        %1622 = vmatprep.subr.bf16.mxu0 0
        %1623 = vmatpush1.bf16.msra.mxu0 %v1578
        %1624 = vmatprep.subr.bf16.mxu0 0
        %1625 = vmatpush1.bf16.msra.mxu0 %v1579
        %1626 = vmatprep.subr.bf16.mxu0 0
        %1627 = vmatpush1.bf16.msra.mxu0 %v1580
        %1628 = vmatprep.subr.bf16.mxu0 0
        %1629 = vmatpush1.bf16.msra.mxu0 %v1581
        %1630 = vmatprep.mubr.bf16.mxu0 %v1462
        %1631 = vmatmul.mubr.bf16.gmra.mrb[0].mxu0 %v1461
        %v1632 = vpop.f32.mrb[0].mxu0
        %v1633 = vadd.f32 %v1500, %v1632
        %v1634 = vpop.f32.mrb[0].mxu0
        %v1635 = vpop.f32.mrb[0].mxu0
        %v1636 = vpop.f32.mrb[0].mxu0
        %1637 = vdwg.mxu0
        %v1638 = vmax.f32 %v1633, 0.0
        %v1639 = vpack.c.bf16 %v1638, %v1638
        %v1640 = vld [vmem:[#allocation10] sm:$0xf]
        %v1641 = vld [vmem:[#allocation10 + $0x4] sm:$0xf]
        %v1642 = vld [vmem:[#allocation10 + $0x8] sm:$0xf]
        %v1643 = vld [vmem:[#allocation10 + $0xc] sm:$0xf]
        %v1644 = vld [vmem:[#allocation10 + $0x10] sm:$0xf]
        %v1645 = vld [vmem:[#allocation10 + $0x14] sm:$0xf]
        %v1646 = vld [vmem:[#allocation10 + $0x18] sm:$0xf]
        %v1647 = vld [vmem:[#allocation10 + $0x1c] sm:$0xf]
        %v1648 = vld [vmem:[#allocation10 + $0x20] sm:$0xf]
        %v1649 = vld [vmem:[#allocation10 + $0x24] sm:$0xf]
        %v1650 = vld [vmem:[#allocation10 + $0x28] sm:$0xf]
        %v1651 = vld [vmem:[#allocation10 + $0x2c] sm:$0xf]
        %v1652 = vld [vmem:[#allocation10 + $0x30] sm:$0xf]
        %v1653 = vld [vmem:[#allocation10 + $0x34] sm:$0xf]
        %v1654 = vld [vmem:[#allocation10 + $0x38] sm:$0xf]
        %v1655 = vld [vmem:[#allocation10 + $0x3c] sm:$0xf]
        %v1656 = vld [vmem:[%s8] sm:$0x1]
        %v1658 = vlaneseq
        %v1659 = vshrl.u32 %v1658, 7
        %v1660 = vsub.s32 0, %v1659
        %v1661 = vrot.slane %v1656, %v1660
        %v1679 = vunpack.c.l.b16 %v1640
        %v1680 = vunpack.c.l.b16 %v1641
        %v1681 = vunpack.c.l.b16 %v1642
        %v1682 = vunpack.c.l.b16 %v1643
        %v1683 = vunpack.c.l.b16 %v1644
        %v1684 = vunpack.c.l.b16 %v1645
        %v1685 = vunpack.c.l.b16 %v1646
        %v1686 = vunpack.c.l.b16 %v1647
        %v1687 = vunpack.c.l.b16 %v1648
        %v1688 = vunpack.c.l.b16 %v1649
        %v1689 = vunpack.c.l.b16 %v1650
        %v1690 = vunpack.c.l.b16 %v1651
        %v1691 = vunpack.c.l.b16 %v1652
        %v1692 = vunpack.c.l.b16 %v1653
        %v1693 = vunpack.c.l.b16 %v1654
        %v1694 = vunpack.c.l.b16 %v1655
        %v1695 = vpack.c.b16 %v1680, %v1679
        %v1696 = vpack.c.b16 %v1682, %v1681
        %v1697 = vpack.c.b16 %v1684, %v1683
        %v1698 = vpack.c.b16 %v1686, %v1685
        %v1699 = vpack.c.b16 %v1688, %v1687
        %v1700 = vpack.c.b16 %v1690, %v1689
        %v1701 = vpack.c.b16 %v1692, %v1691
        %v1702 = vpack.c.b16 %v1694, %v1693
        %1711 = vmatprep.subr.bf16.mxu0 0
        %1712 = vmatpush1.bf16.msra.mxu0 %v1695
        %1713 = vmatprep.subr.bf16.mxu0 0
        %1714 = vmatpush1.bf16.msra.mxu0 %v1696
        %1715 = vmatprep.subr.bf16.mxu0 0
        %1716 = vmatpush1.bf16.msra.mxu0 %v1697
        %1717 = vmatprep.subr.bf16.mxu0 0
        %1718 = vmatpush1.bf16.msra.mxu0 %v1698
        %1719 = vmatprep.subr.bf16.mxu0 0
        %1720 = vmatpush1.bf16.msra.mxu0 %v1699
        %1721 = vmatprep.subr.bf16.mxu0 0
        %1722 = vmatpush1.bf16.msra.mxu0 %v1700
        %1723 = vmatprep.subr.bf16.mxu0 0
        %1724 = vmatpush1.bf16.msra.mxu0 %v1701
        %1725 = vmatprep.subr.bf16.mxu0 0
        %1726 = vmatpush1.bf16.msra.mxu0 %v1702
        %1727 = vmatprep.subr.bf16.mxu0 0
        %1728 = vmatpush1.bf16.msra.mxu0 0
        %1729 = vmatprep.subr.bf16.mxu0 0
        %1730 = vmatpush1.bf16.msra.mxu0 0
        %1731 = vmatprep.subr.bf16.mxu0 0
        %1732 = vmatpush1.bf16.msra.mxu0 0
        %1733 = vmatprep.subr.bf16.mxu0 0
        %1734 = vmatpush1.bf16.msra.mxu0 0
        %1735 = vmatprep.subr.bf16.mxu0 0
        %1736 = vmatpush1.bf16.msra.mxu0 0
        %1737 = vmatprep.subr.bf16.mxu0 0
        %1738 = vmatpush1.bf16.msra.mxu0 0
        %1739 = vmatprep.subr.bf16.mxu0 0
        %1740 = vmatpush1.bf16.msra.mxu0 0
        %1741 = vmatprep.subr.bf16.mxu0 0
        %1742 = vmatpush1.bf16.msra.mxu0 0
        %1743 = vmatprep.mubr.bf16.mxu0 0
        %1744 = vmatmul.mubr.bf16.gmra.mrb[0].mxu0 %v1639
        %v1745 = vpop.f32.mrb[0].mxu0
        %v1746 = vadd.f32 %v1661, %v1745
        %v1747 = vpop.f32.mrb[0].mxu0
        %v1748 = vpop.f32.mrb[0].mxu0
        %v1749 = vpop.f32.mrb[0].mxu0
        %1750 = vdwg.mxu0
        %v1751 = vmax.f32 %v1746, 0.0
        %v1752 = vpack.c.bf16 %v1751, %v1751
        %v1753 = vld [vmem:[#allocation11] sm:$0xf]
        %v1754 = vld [vmem:[#allocation11 + $0x4] sm:$0xf]
        %v1755 = vld [vmem:[#allocation11 + $0x8] sm:$0xf]
        %v1756 = vld [vmem:[#allocation11 + $0xc] sm:$0xf]
        %v1757 = vld [vmem:[#allocation11 + $0x10] sm:$0xf]
        %v1758 = vld [vmem:[#allocation11 + $0x14] sm:$0xf]
        %v1759 = vld [vmem:[#allocation11 + $0x18] sm:$0xf]
        %v1760 = vld [vmem:[#allocation11 + $0x1c] sm:$0xf]
        %v1761 = vld [vmem:[#allocation11 + $0x20] sm:$0xf]
        %v1762 = vld [vmem:[#allocation11 + $0x24] sm:$0xf]
        %v1763 = vld [vmem:[#allocation11 + $0x28] sm:$0xf]
        %v1764 = vld [vmem:[#allocation11 + $0x2c] sm:$0xf]
        %v1765 = vld [vmem:[#allocation11 + $0x30] sm:$0xf]
        %v1766 = vld [vmem:[#allocation11 + $0x34] sm:$0xf]
        %v1767 = vld [vmem:[#allocation11 + $0x38] sm:$0xf]
        %v1768 = vld [vmem:[#allocation11 + $0x3c] sm:$0xf]
        %v1769 = vld [vmem:[%s10] sm:$0x1]
        %v1771 = vlaneseq
        %v1772 = vshrl.u32 %v1771, 7
        %v1773 = vsub.s32 0, %v1772
        %v1774 = vrot.slane %v1769, %v1773
        %v1792 = vunpack.c.l.b16 %v1753
        %v1793 = vunpack.c.l.b16 %v1754
        %v1794 = vunpack.c.l.b16 %v1755
        %v1795 = vunpack.c.l.b16 %v1756
        %v1796 = vunpack.c.l.b16 %v1757
        %v1797 = vunpack.c.l.b16 %v1758
        %v1798 = vunpack.c.l.b16 %v1759
        %v1799 = vunpack.c.l.b16 %v1760
        %v1800 = vunpack.c.l.b16 %v1761
        %v1801 = vunpack.c.l.b16 %v1762
        %v1802 = vunpack.c.l.b16 %v1763
        %v1803 = vunpack.c.l.b16 %v1764
        %v1804 = vunpack.c.l.b16 %v1765
        %v1805 = vunpack.c.l.b16 %v1766
        %v1806 = vunpack.c.l.b16 %v1767
        %v1807 = vunpack.c.l.b16 %v1768
        %v1808 = vpack.c.b16 %v1793, %v1792
        %v1809 = vpack.c.b16 %v1795, %v1794
        %v1810 = vpack.c.b16 %v1797, %v1796
        %v1811 = vpack.c.b16 %v1799, %v1798
        %v1812 = vpack.c.b16 %v1801, %v1800
        %v1813 = vpack.c.b16 %v1803, %v1802
        %v1814 = vpack.c.b16 %v1805, %v1804
        %v1815 = vpack.c.b16 %v1807, %v1806
        %1824 = vmatprep.subr.bf16.mxu0 0
        %1825 = vmatpush1.bf16.msra.mxu0 %v1808
        %1826 = vmatprep.subr.bf16.mxu0 0
        %1827 = vmatpush1.bf16.msra.mxu0 %v1809
        %1828 = vmatprep.subr.bf16.mxu0 0
        %1829 = vmatpush1.bf16.msra.mxu0 %v1810
        %1830 = vmatprep.subr.bf16.mxu0 0
        %1831 = vmatpush1.bf16.msra.mxu0 %v1811
        %1832 = vmatprep.subr.bf16.mxu0 0
        %1833 = vmatpush1.bf16.msra.mxu0 %v1812
        %1834 = vmatprep.subr.bf16.mxu0 0
        %1835 = vmatpush1.bf16.msra.mxu0 %v1813
        %1836 = vmatprep.subr.bf16.mxu0 0
        %1837 = vmatpush1.bf16.msra.mxu0 %v1814
        %1838 = vmatprep.subr.bf16.mxu0 0
        %1839 = vmatpush1.bf16.msra.mxu0 %v1815
        %1840 = vmatprep.subr.bf16.mxu0 0
        %1841 = vmatpush1.bf16.msra.mxu0 0
        %1842 = vmatprep.subr.bf16.mxu0 0
        %1843 = vmatpush1.bf16.msra.mxu0 0
        %1844 = vmatprep.subr.bf16.mxu0 0
        %1845 = vmatpush1.bf16.msra.mxu0 0
        %1846 = vmatprep.subr.bf16.mxu0 0
        %1847 = vmatpush1.bf16.msra.mxu0 0
        %1848 = vmatprep.subr.bf16.mxu0 0
        %1849 = vmatpush1.bf16.msra.mxu0 0
        %1850 = vmatprep.subr.bf16.mxu0 0
        %1851 = vmatpush1.bf16.msra.mxu0 0
        %1852 = vmatprep.subr.bf16.mxu0 0
        %1853 = vmatpush1.bf16.msra.mxu0 0
        %1854 = vmatprep.subr.bf16.mxu0 0
        %1855 = vmatpush1.bf16.msra.mxu0 0
        %1856 = vmatprep.mubr.bf16.mxu0 0
        %1857 = vmatmul.mubr.bf16.gmra.mrb[0].mxu0 %v1752
        %v1858 = vpop.f32.mrb[0].mxu0
        %v1859 = vadd.f32 %v1774, %v1858
        %v1860 = vpop.f32.mrb[0].mxu0
        %v1861 = vpop.f32.mrb[0].mxu0
        %v1862 = vpop.f32.mrb[0].mxu0
        %1863 = vdwg.mxu0
        %1864 = vmax.xlane.f32.xlu0 %v1859
        %v1865 = vpop.xlane.xlu0 %1864
        %v1866 = vsub.f32 %v1859, %v1865
        %v1867 = vmul.f32 %v1866, 1.442695
        %v1868 = vpow.pop %v1867
        %1869 = vadd.xlane.f32.xlu0 %v1868
        %v1870 = vpop.xlane.xlu0 %1869
        %v1871 = vrcp.pop %v1870
        %v1872 = vmul.f32 %v1868, %v1871
        %1873 = vst [vmem:[%s475] sm:$0xff] %v1872
        %s1874 = sand.u32 %s275, 1
        %s1875 = scalar_lea.sflag [#allocation4], %s1874
        %s1876 = sand.u32 %s275, 1
        %s1877 = smul.addr %s1876, 8
        %s1878 = scalar_lea.vmem [#allocation13], %s1877
        // Predicated region
        $region89: #{tpu_custom_call.1} parent=63 // pred_check
          %p1879 = pneg %p285
        $region90: #{tpu_custom_call.1} parent=63 // pred_check_branch
          %1881 = sbr.rel (%p1879) target = $region92
        $region91: #{tpu_custom_call.1} parent=63 // pred_region
          %s1883 = ssub.s32 128, 128
          %1884 = vsyncadd %s1875, %s1883
          %s1885 = smul.addr %s31, 128
          %s1886 = scalar_lea.hbm %s11, %s1885
          %s1888 = sshll.u32 %s1878, 4
          %s1889 = int_to_ptr.vmem [resolvable:$true] %s1888
          %1891 = dma.vmem_to_hbm [thread:$0]  %s1889, 128, %s1886, %s1875
        $region92: #{tpu_custom_call.1} parent=63 // pred_fallthru
          _
      $region64: #{tpu_custom_call.1} parent=5 // pred_fallthru
        _
      %p1892 = scmp.le.s32.totalorder 2, %s26
      // Predicated region
      $region93: #{tpu_custom_call.1} parent=5 // pred_check
        %p1893 = pneg %p1892
      $region94: #{tpu_custom_call.1} parent=5 // pred_check_branch
        %1895 = sbr.rel (%p1893) target = $region96
      $region95: #{tpu_custom_call.1} parent=5 // pred_region
        %s1896 = ssub.s32 %s26, 2
        // Predicated region
        $region97: #{tpu_custom_call.1} parent=95 // pred_check
          %p1897 = pneg %p291
        $region98: #{tpu_custom_call.1} parent=95 // pred_check_branch
          %1899 = sbr.rel (%p1897) target = $region100
        $region99: #{tpu_custom_call.1} parent=95 // pred_region
          %s1900 = sand.u32 %s276, 1
          %s1901 = scalar_lea.sflag [#allocation4], %s1900
          %s1902 = sand.u32 %s276, 1
          %s1903 = smul.addr %s1902, 8
          %s1904 = scalar_lea.vmem [#allocation13], %s1903
          %1905 = dma.done %s1901, 128
        $region100: #{tpu_custom_call.1} parent=95 // pred_fallthru
          _
      $region96: #{tpu_custom_call.1} parent=5 // pred_fallthru
        _
    $region6: #{tpu_custom_call.1} parent=1 // loop_footer
      %s30 = sadd.s32 1, %s26
    $region7: #{tpu_custom_call.1} parent=1 // loop_footer_branch
      %25 = sbr.rel target = $region3
    $region8: #{tpu_custom_call.1} parent=1 // loop_exit
      _
    %1906 = vsyncpa [#allocation3], 1
    %s1907 = scalar_lea.sflag [#allocation3], 1
    %1908 = vsyncpa %s1907, 1
    %1909 = vsyncpa [#allocation6], 1
    %1910 = vsyncpa [#allocation9], 1
    %1911 = vsyncpa [#allocation12], 1
    %1912 = vsyncpa [#allocation4], 1
    %s1913 = scalar_lea.sflag [#allocation4], 1
    %1914 = vsyncpa %s1913, 1

</llo_original>
